<compile_context>
chip_gen: v7x
topology: tpu7x:2x2x1
jax: 0.10.0
libtpu: 0.0.40
codegen_flags: <defaults>
</compile_context>

<pallas_src>
import functools

import jax
import jax.numpy as jnp
from jax import lax
from jax.experimental import pallas as pl
from jax.experimental.pallas import tpu as pltpu


# ----------------------------- config (deterministic, in-script) -----------------------------
POSITIVE_MARGIN = 0.1
NEGATIVE_MARGIN = 1.4
POSITIVE_OPTIMAL = 0.1
NEGATIVE_OPTIMAL = 1.4
LOG_SCALE = 24.0
POSITIVE_OVERLAP = 0.1


def _softplus(x):
    # numerically stable softplus
    return jnp.maximum(x, 0.0) + jnp.log(1.0 + jnp.exp(-jnp.abs(x)))


def coarse_matching_loss_kernel(ridx_ref, sidx_ref, vovl_ref, ref_ref, src_ref, out_ref, *,
                                pos_margin, neg_margin, pos_optimal, neg_optimal,
                                log_scale, positive_overlap):
    n = ref_ref.shape[0]          # ref nodes
    m = src_ref.shape[0]          # src nodes
    k = ridx_ref.shape[0]         # gt correspondences

    # ---- build the dense overlap matrix in-kernel from the sparse gt pairs (SMEM scalars) ----
    # Single linear-index int32 iota keeps only one (N, M) int temp live during the loop.
    lin = (lax.broadcasted_iota(jnp.int32, (n, m), 0) * m
           + lax.broadcasted_iota(jnp.int32, (n, m), 1))

    def scatter_body(i, ovl):
        tgt = ridx_ref[i] * m + sidx_ref[i]
        return jnp.where(lin == tgt, vovl_ref[i], ovl)        # "set" semantics (matches reference)

    ovl = lax.fori_loop(0, k, scatter_body, jnp.zeros((n, m), jnp.float32))

    # masks / scales; `ovl` and `lin` are dead after this block
    pos_masks = ovl > positive_overlap                          # bool (N, M)
    neg_masks = ovl == 0.0                                      # bool (N, M)
    pos_scales = jnp.sqrt(jnp.where(pos_masks, ovl, 0.0))       # (N, M)

    # anchors with both a positive and a negative pair (bool any-reductions, no float masks)
    row_w = (jnp.any(pos_masks, axis=-1, keepdims=True)
             & jnp.any(neg_masks, axis=-1, keepdims=True)).astype(jnp.float32)   # (N, 1)
    col_w = (jnp.any(pos_masks, axis=-2, keepdims=True)
             & jnp.any(neg_masks, axis=-2, keepdims=True)).astype(jnp.float32)   # (1, M)

    # ---- pairwise feature distance: contract on last dims of both operands (no src.T) ----
    xy = lax.dot_general(ref_ref[...], src_ref[...],
                         dimension_numbers=(((1,), (1,)), ((), ())),
                         preferred_element_type=jnp.float32)    # (N, M)
    feat_dists = jnp.sqrt(jnp.maximum(2.0 - 2.0 * xy, 0.0))

    # ---- positive branch: fully consumed before the negative branch is materialized ----
    # Non-positive entries keep logit == 0 exactly (weight zeroed, NOT logit set to -inf),
    # faithfully mirroring the reference.
    pos_weights = jnp.where(pos_masks,
                            jnp.maximum(feat_dists - pos_optimal, 0.0) * pos_scales, 0.0)
    pos_logits = log_scale * (feat_dists - pos_margin) * pos_weights
    m_pos = jnp.max(pos_logits)                                 # scalar shared max
    e_pos = jnp.exp(pos_logits - m_pos)                         # ONE full-matrix exp (row + col)
    lse_pos_row = jnp.log(jnp.sum(e_pos, axis=-1, keepdims=True)) + m_pos   # (N, 1)
    lse_pos_col = jnp.log(jnp.sum(e_pos, axis=-2, keepdims=True)) + m_pos   # (1, M)

    # ---- negative branch ----
    neg_weights = jnp.where(neg_masks, jnp.maximum(neg_optimal - feat_dists, 0.0), 0.0)
    neg_logits = log_scale * (neg_margin - feat_dists) * neg_weights
    m_neg = jnp.max(neg_logits)
    e_neg = jnp.exp(neg_logits - m_neg)                         # ONE full-matrix exp (row + col)
    lse_neg_row = jnp.log(jnp.sum(e_neg, axis=-1, keepdims=True)) + m_neg   # (N, 1)
    lse_neg_col = jnp.log(jnp.sum(e_neg, axis=-2, keepdims=True)) + m_neg   # (1, M)

    inv_log_scale = 1.0 / log_scale                             # compile-time constant
    loss_row = _softplus(lse_pos_row + lse_neg_row) * inv_log_scale         # (N, 1)
    loss_col = _softplus(lse_pos_col + lse_neg_col) * inv_log_scale         # (1, M)

    # masked means; denominators via approx reciprocal on the EUP slot
    row_den = jnp.sum(row_w).reshape(1, 1)
    col_den = jnp.sum(col_w).reshape(1, 1)
    mean_row = jnp.sum(loss_row * row_w) * pl.reciprocal(row_den, approx=True)[0, 0]
    mean_col = jnp.sum(loss_col * col_w) * pl.reciprocal(col_den, approx=True)[0, 0]

    out_ref[0] = 0.5 * (mean_row + mean_col)


def coarse_matching_loss(ref_feats, src_feats, gt_node_corr_indices, gt_node_corr_overlaps):
    """JAX wrapper: passes sparse gt correspondences straight to the kernel (SMEM); no dense
    HBM scatter is performed outside the kernel."""
    n, c = ref_feats.shape
    m = src_feats.shape[0]

    ridx = gt_node_corr_indices[:, 0].astype(jnp.int32)
    sidx = gt_node_corr_indices[:, 1].astype(jnp.int32)
    vovl = gt_node_corr_overlaps.astype(jnp.float32)

    kernel = functools.partial(
        coarse_matching_loss_kernel,
        pos_margin=POSITIVE_MARGIN, neg_margin=NEGATIVE_MARGIN,
        pos_optimal=POSITIVE_OPTIMAL, neg_optimal=NEGATIVE_OPTIMAL,
        log_scale=LOG_SCALE, positive_overlap=POSITIVE_OVERLAP)

    # rough live-VMEM estimate: a few (N, M) f32 temporaries + feature blocks, with headroom
    est_vmem = 8 * n * m * 4 + 4 * (n + m) * c * 4
    vmem_limit = int(min(max(est_vmem, 32 << 20), 100 << 20))

    loss = pl.pallas_call(
        kernel,
        out_shape=jax.ShapeDtypeStruct((1,), jnp.float32),
        in_specs=[
            pl.BlockSpec(memory_space=pltpu.MemorySpace.SMEM),   # gt ref indices (K,)
            pl.BlockSpec(memory_space=pltpu.MemorySpace.SMEM),   # gt src indices (K,)
            pl.BlockSpec(memory_space=pltpu.MemorySpace.SMEM),   # gt overlaps    (K,)
            pl.BlockSpec(memory_space=pltpu.MemorySpace.VMEM),   # ref_feats (N, C)
            pl.BlockSpec(memory_space=pltpu.MemorySpace.VMEM),   # src_feats (M, C)
        ],
        out_specs=pl.BlockSpec(memory_space=pltpu.MemorySpace.SMEM),
        compiler_params=pltpu.CompilerParams(vmem_limit_bytes=vmem_limit),
    )(ridx, sidx, vovl, ref_feats.astype(jnp.float32), src_feats.astype(jnp.float32))
    return loss[0]


# ----------------------------- pure-JAX reference (validation) -----------------------------
def _reference_loss(ref_feats, src_feats, gt_node_corr_indices, gt_node_corr_overlaps):
    n, m = ref_feats.shape[0], src_feats.shape[0]
    dists = jnp.sqrt(jnp.maximum(2.0 - 2.0 * ref_feats @ src_feats.T, 0.0))
    ovl = jnp.zeros((n, m), jnp.float32).at[
        gt_node_corr_indices[:, 0], gt_node_corr_indices[:, 1]].set(
        gt_node_corr_overlaps.astype(jnp.float32))
    pos_f = (ovl > POSITIVE_OVERLAP).astype(jnp.float32)
    neg_f = (ovl == 0.0).astype(jnp.float32)
    pos_scales = jnp.sqrt(ovl * pos_f)
    row_m = (pos_f.sum(-1) > 0) & (neg_f.sum(-1) > 0)
    col_m = (pos_f.sum(0) > 0) & (neg_f.sum(0) > 0)
    pos_w = jnp.maximum(dists - 1e5 * (1.0 - pos_f) - POSITIVE_OPTIMAL, 0.0) * pos_scales
    neg_w = jnp.maximum(NEGATIVE_OPTIMAL - (dists + 1e5 * (1.0 - neg_f)), 0.0)
    pos_logits = LOG_SCALE * (dists - POSITIVE_MARGIN) * pos_w
    neg_logits = LOG_SCALE * (NEGATIVE_MARGIN - dists) * neg_w
    lr = jax.nn.softplus(jax.nn.logsumexp(pos_logits, axis=-1)
                         + jax.nn.logsumexp(neg_logits, axis=-1)) / LOG_SCALE
    lc = jax.nn.softplus(jax.nn.logsumexp(pos_logits, axis=0)
                         + jax.nn.logsumexp(neg_logits, axis=0)) / LOG_SCALE
    mean_row = jnp.sum(lr * row_m) / jnp.sum(row_m)
    mean_col = jnp.sum(lc * col_m) / jnp.sum(col_m)
    return 0.5 * (mean_row + mean_col)


if __name__ == "__main__":
    key = jax.random.PRNGKey(0)
    k1, k2, k3, k4, k5 = jax.random.split(key, 5)

    N, M, C, K = 128, 128, 32, 16   # ref nodes, src nodes, feat dim, gt correspondences

    ref_feats = jax.random.normal(k1, (N, C), jnp.float32)
    src_feats = jax.random.normal(k2, (M, C), jnp.float32)
    # features are L2-normalized (pairwise_distance with normalized=True)
    ref_feats = ref_feats / jnp.linalg.norm(ref_feats, axis=-1, keepdims=True)
    src_feats = src_feats / jnp.linalg.norm(src_feats, axis=-1, keepdims=True)

    # unique (ref, src) correspondence pairs with overlaps comfortably above the threshold
    ref_idx = jax.random.permutation(k3, N)[:K]
    src_idx = jax.random.permutation(k4, M)[:K]
    gt_node_corr_indices = jnp.stack([ref_idx, src_idx], axis=1).astype(jnp.int32)  # (K, 2)
    gt_node_corr_overlaps = jax.random.uniform(k5, (K,), jnp.float32, 0.2, 1.0)

    loss = jax.jit(coarse_matching_loss)(
        ref_feats, src_feats, gt_node_corr_indices, gt_node_corr_overlaps)
    jax.block_until_ready(loss)

    # gate the shared-max logsumexp / approx-reciprocal optimizations behind a tolerance check
    ref_val = _reference_loss(ref_feats, src_feats, gt_node_corr_indices, gt_node_corr_overlaps)
    err = abs(float(loss) - float(ref_val))
    tol = 1e-2 * max(1.0, abs(float(ref_val)))
    assert err <= tol, f"kernel={float(loss)} ref={float(ref_val)} err={err}"

    print("KERNEL_OK")
</pallas_src>

<mosaic_0001>
module attributes {stable_mosaic.version = 11 : i64} {
  func.func @coarse_matching_loss_kernel(%arg0: memref<16xi32, #tpu.memory_space<smem>>, %arg1: memref<16xi32, #tpu.memory_space<smem>>, %arg2: memref<16xf32, #tpu.memory_space<smem>>, %arg3: memref<128x32xf32, #tpu.memory_space<vmem>>, %arg4: memref<128x32xf32, #tpu.memory_space<vmem>>, %arg5: memref<1xf32, #tpu.memory_space<smem>>) attributes {dimension_semantics = [], scalar_prefetch = 0 : i64, scratch_operands = 0 : i64, tpu.core_type = #tpu.core_type<tc>} {
    %0 = tpu.iota {dimensions = array<i32: 0>} : vector<128x128xi32>
    %c128_i32 = arith.constant 128 : i32
    %1 = vector.broadcast %c128_i32 : i32 to vector<128x128xi32>
    %2 = arith.muli %0, %1 : vector<128x128xi32>
    %3 = tpu.iota {dimensions = array<i32: 1>} : vector<128x128xi32>
    %4 = arith.addi %2, %3 : vector<128x128xi32>
    %cst = arith.constant 0.000000e+00 : f32
    %5 = vector.broadcast %cst : f32 to vector<128x128xf32>
    %c0_i32 = arith.constant 0 : i32
    %c16_i32 = arith.constant 16 : i32
    %6 = arith.addi %c0_i32, %c16_i32 : i32
    %c1_i32 = arith.constant 1 : i32
    %7 = scf.for %arg6 = %c0_i32 to %6 step %c1_i32 iter_args(%arg7 = %5) -> (vector<128x128xf32>)  : i32 {
      %171 = arith.index_cast %arg6 : i32 to index
      %172 = memref.load %arg0[%171] : memref<16xi32, #tpu.memory_space<smem>>
      %c128_i32_57 = arith.constant 128 : i32
      %173 = arith.muli %172, %c128_i32_57 : i32
      %174 = arith.index_cast %arg6 : i32 to index
      %175 = memref.load %arg1[%174] : memref<16xi32, #tpu.memory_space<smem>>
      %176 = arith.addi %173, %175 : i32
      %177 = vector.broadcast %176 : i32 to vector<128x128xi32>
      %178 = arith.cmpi eq, %4, %177 : vector<128x128xi32>
      %179 = arith.index_cast %arg6 : i32 to index
      %180 = memref.load %arg2[%179] : memref<16xf32, #tpu.memory_space<smem>>
      %181 = vector.broadcast %180 : f32 to vector<128x128xf32>
      %182 = arith.select %178, %181, %arg7 : vector<128x128xi1>, vector<128x128xf32>
      scf.yield %182 : vector<128x128xf32>
    }
    %c16_i32_0 = arith.constant 16 : i32
    %cst_1 = arith.constant 1.000000e-01 : f32
    %8 = vector.broadcast %cst_1 : f32 to vector<128x128xf32>
    %9 = arith.cmpf ogt, %7, %8 : vector<128x128xf32>
    %cst_2 = arith.constant 0.000000e+00 : f32
    %10 = vector.broadcast %cst_2 : f32 to vector<128x128xf32>
    %11 = arith.cmpf oeq, %7, %10 : vector<128x128xf32>
    %cst_3 = arith.constant 0.000000e+00 : f32
    %12 = vector.broadcast %cst_3 : f32 to vector<128x128xf32>
    %13 = arith.select %9, %7, %12 : vector<128x128xi1>, vector<128x128xf32>
    %14 = math.sqrt %13 : vector<128x128xf32>
    %cst_4 = arith.constant 1.000000e+00 : f32
    %cst_5 = arith.constant 0.000000e+00 : f32
    %15 = vector.broadcast %cst_4 : f32 to vector<128x128xf32>
    %16 = vector.broadcast %cst_5 : f32 to vector<128x128xf32>
    %17 = arith.select %9, %15, %16 : vector<128x128xi1>, vector<128x128xf32>
    %cst_6 = arith.constant dense<0xFF800000> : vector<128xf32>
    %18 = vector.multi_reduction <maximumf>, %17, %cst_6 [1] : vector<128x128xf32> to vector<128xf32>
    %cst_7 = arith.constant 0.000000e+00 : f32
    %19 = vector.broadcast %cst_7 : f32 to vector<128xf32>
    %20 = arith.cmpf ogt, %18, %19 : vector<128xf32>
    %21 = vector.shape_cast %20 : vector<128xi1> to vector<128x1xi1>
    %cst_8 = arith.constant 1.000000e+00 : f32
    %cst_9 = arith.constant 0.000000e+00 : f32
    %22 = vector.broadcast %cst_8 : f32 to vector<128x128xf32>
    %23 = vector.broadcast %cst_9 : f32 to vector<128x128xf32>
    %24 = arith.select %11, %22, %23 : vector<128x128xi1>, vector<128x128xf32>
    %cst_10 = arith.constant dense<0xFF800000> : vector<128xf32>
    %25 = vector.multi_reduction <maximumf>, %24, %cst_10 [1] : vector<128x128xf32> to vector<128xf32>
    %cst_11 = arith.constant 0.000000e+00 : f32
    %26 = vector.broadcast %cst_11 : f32 to vector<128xf32>
    %27 = arith.cmpf ogt, %25, %26 : vector<128xf32>
    %28 = vector.shape_cast %27 : vector<128xi1> to vector<128x1xi1>
    %29 = arith.andi %21, %28 : vector<128x1xi1>
    %30 = arith.extui %29 : vector<128x1xi1> to vector<128x1xi32>
    %31 = arith.sitofp %30 : vector<128x1xi32> to vector<128x1xf32>
    %cst_12 = arith.constant 1.000000e+00 : f32
    %cst_13 = arith.constant 0.000000e+00 : f32
    %32 = vector.broadcast %cst_12 : f32 to vector<128x128xf32>
    %33 = vector.broadcast %cst_13 : f32 to vector<128x128xf32>
    %34 = arith.select %9, %32, %33 : vector<128x128xi1>, vector<128x128xf32>
    %cst_14 = arith.constant dense<0xFF800000> : vector<128xf32>
    %35 = vector.multi_reduction <maximumf>, %34, %cst_14 [0] : vector<128x128xf32> to vector<128xf32>
    %cst_15 = arith.constant 0.000000e+00 : f32
    %36 = vector.broadcast %cst_15 : f32 to vector<128xf32>
    %37 = arith.cmpf ogt, %35, %36 : vector<128xf32>
    %38 = vector.shape_cast %37 : vector<128xi1> to vector<1x128xi1>
    %cst_16 = arith.constant 1.000000e+00 : f32
    %cst_17 = arith.constant 0.000000e+00 : f32
    %39 = vector.broadcast %cst_16 : f32 to vector<128x128xf32>
    %40 = vector.broadcast %cst_17 : f32 to vector<128x128xf32>
    %41 = arith.select %11, %39, %40 : vector<128x128xi1>, vector<128x128xf32>
    %cst_18 = arith.constant dense<0xFF800000> : vector<128xf32>
    %42 = vector.multi_reduction <maximumf>, %41, %cst_18 [0] : vector<128x128xf32> to vector<128xf32>
    %cst_19 = arith.constant 0.000000e+00 : f32
    %43 = vector.broadcast %cst_19 : f32 to vector<128xf32>
    %44 = arith.cmpf ogt, %42, %43 : vector<128xf32>
    %45 = vector.shape_cast %44 : vector<128xi1> to vector<1x128xi1>
    %46 = arith.andi %38, %45 : vector<1x128xi1>
    %47 = arith.extui %46 : vector<1x128xi1> to vector<1x128xi32>
    %48 = arith.sitofp %47 : vector<1x128xi32> to vector<1x128xf32>
    %c0 = arith.constant 0 : index
    %c0_20 = arith.constant 0 : index
    %49 = vector.load %arg3[%c0, %c0_20] : memref<128x32xf32, #tpu.memory_space<vmem>>, vector<128x32xf32>
    %c0_21 = arith.constant 0 : index
    %c0_22 = arith.constant 0 : index
    %50 = vector.load %arg4[%c0_21, %c0_22] : memref<128x32xf32, #tpu.memory_space<vmem>>, vector<128x32xf32>
    %cst_23 = arith.constant dense<0.000000e+00> : vector<128x128xf32>
    %51 = tpu.matmul %49, %50, %cst_23 {dimension_numbers = #tpu.dot_dimension_numbers<[1], [1], [0], [0], [0, 0, 1, 0], [], []>} : vector<128x32xf32>, vector<128x32xf32>, vector<128x128xf32> -> vector<128x128xf32>
    %cst_24 = arith.constant 2.000000e+00 : f32
    %52 = vector.broadcast %cst_24 : f32 to vector<128x128xf32>
    %53 = arith.mulf %52, %51 : vector<128x128xf32>
    %cst_25 = arith.constant 2.000000e+00 : f32
    %54 = vector.broadcast %cst_25 : f32 to vector<128x128xf32>
    %55 = arith.subf %54, %53 : vector<128x128xf32>
    %cst_26 = arith.constant 0.000000e+00 : f32
    %56 = vector.broadcast %cst_26 : f32 to vector<128x128xf32>
    %57 = arith.maximumf %55, %56 : vector<128x128xf32>
    %58 = math.sqrt %57 : vector<128x128xf32>
    %cst_27 = arith.constant 1.000000e-01 : f32
    %59 = vector.broadcast %cst_27 : f32 to vector<128x128xf32>
    %60 = arith.subf %58, %59 : vector<128x128xf32>
    %cst_28 = arith.constant 0.000000e+00 : f32
    %61 = vector.broadcast %cst_28 : f32 to vector<128x128xf32>
    %62 = arith.maximumf %60, %61 : vector<128x128xf32>
    %63 = arith.mulf %62, %14 : vector<128x128xf32>
    %cst_29 = arith.constant 0.000000e+00 : f32
    %64 = vector.broadcast %cst_29 : f32 to vector<128x128xf32>
    %65 = arith.select %9, %63, %64 : vector<128x128xi1>, vector<128x128xf32>
    %cst_30 = arith.constant 1.000000e-01 : f32
    %66 = vector.broadcast %cst_30 : f32 to vector<128x128xf32>
    %67 = arith.subf %58, %66 : vector<128x128xf32>
    %cst_31 = arith.constant 2.400000e+01 : f32
    %68 = vector.broadcast %cst_31 : f32 to vector<128x128xf32>
    %69 = arith.mulf %68, %67 : vector<128x128xf32>
    %70 = arith.mulf %69, %65 : vector<128x128xf32>
    %71 = vector.shape_cast %70 : vector<128x128xf32> to vector<1x128x128xf32>
    %cst_32 = arith.constant dense<0xFF800000> : vector<1xf32>
    %72 = vector.multi_reduction <maximumf>, %71, %cst_32 [1, 2] : vector<1x128x128xf32> to vector<1xf32>
    %73 = vector.shape_cast %72 : vector<1xf32> to vector<1x1x1xf32>
    %74 = vector.extract %73[0, 0, 0] : f32 from vector<1x1x1xf32>
    %75 = vector.broadcast %74 : f32 to vector<128x128xf32>
    %76 = arith.subf %70, %75 : vector<128x128xf32>
    %77 = math.exp %76 : vector<128x128xf32>
    %cst_33 = arith.constant dense<0.000000e+00> : vector<128xf32>
    %78 = vector.multi_reduction <add>, %77, %cst_33 [1] : vector<128x128xf32> to vector<128xf32>
    %79 = vector.shape_cast %78 : vector<128xf32> to vector<128x1xf32>
    %80 = math.log %79 : vector<128x1xf32>
    %81 = vector.broadcast %74 : f32 to vector<128x1xf32>
    %82 = arith.addf %80, %81 : vector<128x1xf32>
    %cst_34 = arith.constant dense<0.000000e+00> : vector<128xf32>
    %83 = vector.multi_reduction <add>, %77, %cst_34 [0] : vector<128x128xf32> to vector<128xf32>
    %84 = vector.shape_cast %83 : vector<128xf32> to vector<1x128xf32>
    %85 = math.log %84 : vector<1x128xf32>
    %86 = vector.broadcast %74 : f32 to vector<1x128xf32>
    %87 = arith.addf %85, %86 : vector<1x128xf32>
    %cst_35 = arith.constant 1.400000e+00 : f32
    %88 = vector.broadcast %cst_35 : f32 to vector<128x128xf32>
    %89 = arith.subf %88, %58 : vector<128x128xf32>
    %cst_36 = arith.constant 0.000000e+00 : f32
    %90 = vector.broadcast %cst_36 : f32 to vector<128x128xf32>
    %91 = arith.maximumf %89, %90 : vector<128x128xf32>
    %cst_37 = arith.constant 0.000000e+00 : f32
    %92 = vector.broadcast %cst_37 : f32 to vector<128x128xf32>
    %93 = arith.select %11, %91, %92 : vector<128x128xi1>, vector<128x128xf32>
    %cst_38 = arith.constant 1.400000e+00 : f32
    %94 = vector.broadcast %cst_38 : f32 to vector<128x128xf32>
    %95 = arith.subf %94, %58 : vector<128x128xf32>
    %cst_39 = arith.constant 2.400000e+01 : f32
    %96 = vector.broadcast %cst_39 : f32 to vector<128x128xf32>
    %97 = arith.mulf %96, %95 : vector<128x128xf32>
    %98 = arith.mulf %97, %93 : vector<128x128xf32>
    %99 = vector.shape_cast %98 : vector<128x128xf32> to vector<1x128x128xf32>
    %cst_40 = arith.constant dense<0xFF800000> : vector<1xf32>
    %100 = vector.multi_reduction <maximumf>, %99, %cst_40 [1, 2] : vector<1x128x128xf32> to vector<1xf32>
    %101 = vector.shape_cast %100 : vector<1xf32> to vector<1x1x1xf32>
    %102 = vector.extract %101[0, 0, 0] : f32 from vector<1x1x1xf32>
    %103 = vector.broadcast %102 : f32 to vector<128x128xf32>
    %104 = arith.subf %98, %103 : vector<128x128xf32>
    %105 = math.exp %104 : vector<128x128xf32>
    %cst_41 = arith.constant dense<0.000000e+00> : vector<128xf32>
    %106 = vector.multi_reduction <add>, %105, %cst_41 [1] : vector<128x128xf32> to vector<128xf32>
    %107 = vector.shape_cast %106 : vector<128xf32> to vector<128x1xf32>
    %108 = math.log %107 : vector<128x1xf32>
    %109 = vector.broadcast %102 : f32 to vector<128x1xf32>
    %110 = arith.addf %108, %109 : vector<128x1xf32>
    %cst_42 = arith.constant dense<0.000000e+00> : vector<128xf32>
    %111 = vector.multi_reduction <add>, %105, %cst_42 [0] : vector<128x128xf32> to vector<128xf32>
    %112 = vector.shape_cast %111 : vector<128xf32> to vector<1x128xf32>
    %113 = math.log %112 : vector<1x128xf32>
    %114 = vector.broadcast %102 : f32 to vector<1x128xf32>
    %115 = arith.addf %113, %114 : vector<1x128xf32>
    %116 = arith.addf %82, %110 : vector<128x1xf32>
    %cst_43 = arith.constant 0.000000e+00 : f32
    %117 = vector.broadcast %cst_43 : f32 to vector<128x1xf32>
    %118 = arith.maximumf %116, %117 : vector<128x1xf32>
    %119 = math.absf %116 : vector<128x1xf32>
    %cst_44 = arith.constant 0.000000e+00 : f32
    %120 = vector.broadcast %cst_44 : f32 to vector<128x1xf32>
    %121 = arith.subf %120, %119 : vector<128x1xf32>
    %122 = math.exp %121 : vector<128x1xf32>
    %cst_45 = arith.constant 1.000000e+00 : f32
    %123 = vector.broadcast %cst_45 : f32 to vector<128x1xf32>
    %124 = arith.addf %123, %122 : vector<128x1xf32>
    %125 = math.log %124 : vector<128x1xf32>
    %126 = arith.addf %118, %125 : vector<128x1xf32>
    %cst_46 = arith.constant 0.0416666679 : f32
    %127 = vector.broadcast %cst_46 : f32 to vector<128x1xf32>
    %128 = arith.mulf %126, %127 : vector<128x1xf32>
    %129 = arith.addf %87, %115 : vector<1x128xf32>
    %cst_47 = arith.constant 0.000000e+00 : f32
    %130 = vector.broadcast %cst_47 : f32 to vector<1x128xf32>
    %131 = arith.maximumf %129, %130 : vector<1x128xf32>
    %132 = math.absf %129 : vector<1x128xf32>
    %cst_48 = arith.constant 0.000000e+00 : f32
    %133 = vector.broadcast %cst_48 : f32 to vector<1x128xf32>
    %134 = arith.subf %133, %132 : vector<1x128xf32>
    %135 = math.exp %134 : vector<1x128xf32>
    %cst_49 = arith.constant 1.000000e+00 : f32
    %136 = vector.broadcast %cst_49 : f32 to vector<1x128xf32>
    %137 = arith.addf %136, %135 : vector<1x128xf32>
    %138 = math.log %137 : vector<1x128xf32>
    %139 = arith.addf %131, %138 : vector<1x128xf32>
    %cst_50 = arith.constant 0.0416666679 : f32
    %140 = vector.broadcast %cst_50 : f32 to vector<1x128xf32>
    %141 = arith.mulf %139, %140 : vector<1x128xf32>
    %142 = vector.shape_cast %31 : vector<128x1xf32> to vector<1x128x1xf32>
    %cst_51 = arith.constant dense<0.000000e+00> : vector<1xf32>
    %143 = vector.multi_reduction <add>, %142, %cst_51 [1, 2] : vector<1x128x1xf32> to vector<1xf32>
    %144 = vector.shape_cast %143 : vector<1xf32> to vector<1x1x1xf32>
    %145 = vector.extract %144[0, 0, 0] : f32 from vector<1x1x1xf32>
    %146 = vector.broadcast %145 : f32 to vector<1x1xf32>
    %147 = vector.shape_cast %48 : vector<1x128xf32> to vector<1x1x128xf32>
    %cst_52 = arith.constant dense<0.000000e+00> : vector<1xf32>
    %148 = vector.multi_reduction <add>, %147, %cst_52 [1, 2] : vector<1x1x128xf32> to vector<1xf32>
    %149 = vector.shape_cast %148 : vector<1xf32> to vector<1x1x1xf32>
    %150 = vector.extract %149[0, 0, 0] : f32 from vector<1x1x1xf32>
    %151 = vector.broadcast %150 : f32 to vector<1x1xf32>
    %152 = arith.mulf %128, %31 : vector<128x1xf32>
    %153 = vector.shape_cast %152 : vector<128x1xf32> to vector<1x128x1xf32>
    %cst_53 = arith.constant dense<0.000000e+00> : vector<1xf32>
    %154 = vector.multi_reduction <add>, %153, %cst_53 [1, 2] : vector<1x128x1xf32> to vector<1xf32>
    %155 = vector.shape_cast %154 : vector<1xf32> to vector<1x1x1xf32>
    %156 = vector.extract %155[0, 0, 0] : f32 from vector<1x1x1xf32>
    %157 = tpu.reciprocal %146 {approx = true} : vector<1x1xf32> -> vector<1x1xf32>
    %158 = vector.extract %157[0, 0] : f32 from vector<1x1xf32>
    %159 = arith.mulf %156, %158 : f32
    %160 = arith.mulf %141, %48 : vector<1x128xf32>
    %161 = vector.shape_cast %160 : vector<1x128xf32> to vector<1x1x128xf32>
    %cst_54 = arith.constant dense<0.000000e+00> : vector<1xf32>
    %162 = vector.multi_reduction <add>, %161, %cst_54 [1, 2] : vector<1x1x128xf32> to vector<1xf32>
    %163 = vector.shape_cast %162 : vector<1xf32> to vector<1x1x1xf32>
    %164 = vector.extract %163[0, 0, 0] : f32 from vector<1x1x1xf32>
    %165 = tpu.reciprocal %151 {approx = true} : vector<1x1xf32> -> vector<1x1xf32>
    %166 = vector.extract %165[0, 0] : f32 from vector<1x1xf32>
    %167 = arith.mulf %164, %166 : f32
    %168 = arith.addf %159, %167 : f32
    %cst_55 = arith.constant 5.000000e-01 : f32
    %169 = arith.mulf %cst_55, %168 : f32
    %c0_56 = arith.constant 0 : index
    %170 = memref.load %arg5[%c0_56] : memref<1xf32, #tpu.memory_space<smem>>
    memref.store %169, %arg5[%c0_56] : memref<1xf32, #tpu.memory_space<smem>>
    return
  }
}

</mosaic_0001>

<llo_original>
// kernel: coarse_matching_loss.1
$region0: #{coarse_matching_loss.1}
  #allocation0 [shape = 'u32[]', space=smem, size = 0x4, offset = 0x4, fixed_abs, tag = 'smem constant byte address 0x4 - core index']
  #allocation1 [shape = 'u32[144,128]{1,0:T(1,128)}', space=vmem, size = 0x12000, scoped, tag = 'internal scratch']
  %s0 = inlined_call_operand.vmem [shape: s32[16], index: 0, kind: input, shape index: {}]
  %s1 = inlined_call_operand.vmem [shape: s32[16], index: 1, kind: input, shape index: {}]
  %s2 = inlined_call_operand.vmem [shape: f32[16], index: 2, kind: input, shape index: {}]
  %s3 = inlined_call_operand.vmem [shape: f32[128,32], index: 3, kind: input, shape index: {}]
  %s4 = inlined_call_operand.vmem [shape: f32[128,32], index: 4, kind: input, shape index: {}]
  %s5 = inlined_call_operand.hbm [shape: f32[1], index: 5, kind: output, shape index: {}]
  %s6 = sld [smem:[#allocation0]]
  $region49: #{coarse_matching_loss.1} parent=0
    _
  %s8 = ssub.s32 1, %s6
  %s9 = scalar_select 0, %s8, %s6
  $region1: #{coarse_matching_loss.1} parent=0
    #allocation2 [shape = 'u8[512]{0}', space=smem, size = 0x200, scoped, tag = 'input window, operand 0, single buffered']
    #allocation3 [shape = 's32[1]{0}', space=sflag, size = 0x4, scoped, tag = 'scoped memory for coarse_matching_loss.1']
    #allocation4 [shape = 's32[1]{0}', space=sflag, size = 0x4, scoped, tag = 'scoped memory for coarse_matching_loss.1']
    #allocation5 [shape = 'u8[512]{0}', space=smem, size = 0x200, scoped, tag = 'input window, operand 1, single buffered']
    #allocation6 [shape = 's32[1]{0}', space=sflag, size = 0x4, scoped, tag = 'scoped memory for coarse_matching_loss.1']
    #allocation7 [shape = 'u8[512]{0}', space=smem, size = 0x200, scoped, tag = 'input window, operand 2, single buffered']
    #allocation8 [shape = 'u8[512]{0}', space=smem, size = 0x200, scoped, tag = 'output window, operand 0, single buffered']
    %10 = vsyncpa [#allocation4], 0
    %11 = vsyncpa [#allocation6], 0
    %12 = vsyncpa [#allocation3], 0
    // Predicated region
    $region2: #{coarse_matching_loss.1} parent=1 // pred_check
      _
    $region3: #{coarse_matching_loss.1} parent=1 // pred_check_branch
      %14 = sbr.rel (0) target = $region5
    $region4: #{coarse_matching_loss.1} parent=1 // pred_region
      %s16 = ssub.s32 16, 16
      %17 = vsyncadd [#allocation4], %s16
      %s19 = sshll.u32 %s0, 4
      %s20 = int_to_ptr.vmem [resolvable:$true] %s19
      %22 = dma.vmem_to_smem %s20, 16, [#allocation2], [#allocation4]
    $region5: #{coarse_matching_loss.1} parent=1 // pred_fallthru
      _
    // Predicated region
    $region6: #{coarse_matching_loss.1} parent=1 // pred_check
      _
    $region7: #{coarse_matching_loss.1} parent=1 // pred_check_branch
      %24 = sbr.rel (0) target = $region9
    $region8: #{coarse_matching_loss.1} parent=1 // pred_region
      %s26 = ssub.s32 16, 16
      %27 = vsyncadd [#allocation6], %s26
      %s29 = sshll.u32 %s1, 4
      %s30 = int_to_ptr.vmem [resolvable:$true] %s29
      %32 = dma.vmem_to_smem %s30, 16, [#allocation5], [#allocation6]
    $region9: #{coarse_matching_loss.1} parent=1 // pred_fallthru
      _
    // Predicated region
    $region10: #{coarse_matching_loss.1} parent=1 // pred_check
      _
    $region11: #{coarse_matching_loss.1} parent=1 // pred_check_branch
      %34 = sbr.rel (0) target = $region13
    $region12: #{coarse_matching_loss.1} parent=1 // pred_region
      %s36 = ssub.s32 16, 16
      %37 = vsyncadd [#allocation6], %s36
      %s39 = sshll.u32 %s2, 4
      %s40 = int_to_ptr.vmem [resolvable:$true] %s39
      %42 = dma.vmem_to_smem %s40, 16, [#allocation7], [#allocation6]
    $region13: #{coarse_matching_loss.1} parent=1 // pred_fallthru
      _
    // Predicated region
    $region14: #{coarse_matching_loss.1} parent=1 // pred_check
      _
    $region15: #{coarse_matching_loss.1} parent=1 // pred_check_branch
      %44 = sbr.rel (0) target = $region17
    $region16: #{coarse_matching_loss.1} parent=1 // pred_region
      _
    $region17: #{coarse_matching_loss.1} parent=1 // pred_fallthru
      _
    // Predicated region
    $region18: #{coarse_matching_loss.1} parent=1 // pred_check
      _
    $region19: #{coarse_matching_loss.1} parent=1 // pred_check_branch
      %46 = sbr.rel (0) target = $region21
    $region20: #{coarse_matching_loss.1} parent=1 // pred_region
      _
    $region21: #{coarse_matching_loss.1} parent=1 // pred_fallthru
      _
    // Predicated region
    $region22: #{coarse_matching_loss.1} parent=1 // pred_check
      _
    $region23: #{coarse_matching_loss.1} parent=1 // pred_check_branch
      %48 = sbr.rel (0) target = $region25
    $region24: #{coarse_matching_loss.1} parent=1 // pred_region
      %49 = dma.done [#allocation4], 16
    $region25: #{coarse_matching_loss.1} parent=1 // pred_fallthru
      _
    // Predicated region
    $region26: #{coarse_matching_loss.1} parent=1 // pred_check
      _
    $region27: #{coarse_matching_loss.1} parent=1 // pred_check_branch
      %51 = sbr.rel (0) target = $region29
    $region28: #{coarse_matching_loss.1} parent=1 // pred_region
      %52 = dma.done [#allocation6], 16
    $region29: #{coarse_matching_loss.1} parent=1 // pred_fallthru
      _
    // Predicated region
    $region30: #{coarse_matching_loss.1} parent=1 // pred_check
      _
    $region31: #{coarse_matching_loss.1} parent=1 // pred_check_branch
      %54 = sbr.rel (0) target = $region33
    $region32: #{coarse_matching_loss.1} parent=1 // pred_region
      %55 = dma.done [#allocation6], 16
    $region33: #{coarse_matching_loss.1} parent=1 // pred_fallthru
      _
    %56 = sfence
    %v57 = vlaneseq
    %v58 = vshrl.u32 %v57, 7
    %v59 = vadd.s32 %v58, 8
    %v60 = vadd.s32 %v58, 16
    %v61 = vadd.s32 %v58, 24
    %v62 = vadd.s32 %v58, 32
    %v63 = vadd.s32 %v58, 40
    %v64 = vadd.s32 %v58, 48
    %v65 = vadd.s32 %v58, 56
    %v66 = vadd.s32 %v58, 64
    %v67 = vadd.s32 %v58, 72
    %v68 = vadd.s32 %v58, 80
    %v69 = vadd.s32 %v58, 88
    %v70 = vadd.s32 %v58, 96
    %v71 = vadd.s32 %v58, 104
    %v72 = vadd.s32 %v58, 112
    %v73 = vadd.s32 %v58, 120
    %v74 = vmul.u32 %v58, 128
    %v75 = vmul.u32 %v59, 128
    %v76 = vmul.u32 %v60, 128
    %v77 = vmul.u32 %v61, 128
    %v78 = vmul.u32 %v62, 128
    %v79 = vmul.u32 %v63, 128
    %v80 = vmul.u32 %v64, 128
    %v81 = vmul.u32 %v65, 128
    %v82 = vmul.u32 %v66, 128
    %v83 = vmul.u32 %v67, 128
    %v84 = vmul.u32 %v68, 128
    %v85 = vmul.u32 %v69, 128
    %v86 = vmul.u32 %v70, 128
    %v87 = vmul.u32 %v71, 128
    %v88 = vmul.u32 %v72, 128
    %v89 = vmul.u32 %v73, 128
    %v90 = vlaneseq
    %v91 = vand.u32 %v90, 127
    %v92 = vadd.s32 %v74, %v91
    %v93 = vadd.s32 %v75, %v91
    %v94 = vadd.s32 %v76, %v91
    %v95 = vadd.s32 %v77, %v91
    %v96 = vadd.s32 %v78, %v91
    %v97 = vadd.s32 %v79, %v91
    %v98 = vadd.s32 %v80, %v91
    %v99 = vadd.s32 %v81, %v91
    %v100 = vadd.s32 %v82, %v91
    %v101 = vadd.s32 %v83, %v91
    %v102 = vadd.s32 %v84, %v91
    %v103 = vadd.s32 %v85, %v91
    %v104 = vadd.s32 %v86, %v91
    %v105 = vadd.s32 %v87, %v91
    %v106 = vadd.s32 %v88, %v91
    %v107 = vadd.s32 %v89, %v91
    loop: start=0, step=1, limit=16
    $region34: #{coarse_matching_loss.1} parent=1 // loop_pre_header
      _
    $region35: #{coarse_matching_loss.1} parent=1 // loop_header
      %s109 = sphi 0, %s113
      %p110 = scmp.ge.s32.totalorder %s109, 16
      %v114 = vphi 0.0, %v153
      %v115 = vphi 0.0, %v154
      %v116 = vphi 0.0, %v155
      %v117 = vphi 0.0, %v156
      %v118 = vphi 0.0, %v157
      %v119 = vphi 0.0, %v158
      %v120 = vphi 0.0, %v159
      %v121 = vphi 0.0, %v160
      %v122 = vphi 0.0, %v161
      %v123 = vphi 0.0, %v162
      %v124 = vphi 0.0, %v163
      %v125 = vphi 0.0, %v164
      %v126 = vphi 0.0, %v165
      %v127 = vphi 0.0, %v166
      %v128 = vphi 0.0, %v167
      %v129 = vphi 0.0, %v168
    $region36: #{coarse_matching_loss.1} parent=1 // loop_header_branch
      %112 = sbr.rel (%p110) target = $region40
    $region37: #{coarse_matching_loss.1} parent=1 // loop_body
      %s130 = sld [smem:[#allocation2 + %s109]]
      %s131 = smul.u32 %s130, 128
      %s132 = sld [smem:[#allocation5 + %s109]]
      %s133 = sadd.s32 %s131, %s132
      %v134 = vstv %s133
      %vm135 = vcmp.eq.s32.totalorder %v92, %v134
      %vm136 = vcmp.eq.s32.totalorder %v93, %v134
      %vm137 = vcmp.eq.s32.totalorder %v94, %v134
      %vm138 = vcmp.eq.s32.totalorder %v95, %v134
      %vm139 = vcmp.eq.s32.totalorder %v96, %v134
      %vm140 = vcmp.eq.s32.totalorder %v97, %v134
      %vm141 = vcmp.eq.s32.totalorder %v98, %v134
      %vm142 = vcmp.eq.s32.totalorder %v99, %v134
      %vm143 = vcmp.eq.s32.totalorder %v100, %v134
      %vm144 = vcmp.eq.s32.totalorder %v101, %v134
      %vm145 = vcmp.eq.s32.totalorder %v102, %v134
      %vm146 = vcmp.eq.s32.totalorder %v103, %v134
      %vm147 = vcmp.eq.s32.totalorder %v104, %v134
      %vm148 = vcmp.eq.s32.totalorder %v105, %v134
      %vm149 = vcmp.eq.s32.totalorder %v106, %v134
      %vm150 = vcmp.eq.s32.totalorder %v107, %v134
      %s151 = sld [smem:[#allocation7 + %s109]]
      %v152 = vstv %s151
      %v153 = vsel %vm135, %v152, %v114
      %v154 = vsel %vm136, %v152, %v115
      %v155 = vsel %vm137, %v152, %v116
      %v156 = vsel %vm138, %v152, %v117
      %v157 = vsel %vm139, %v152, %v118
      %v158 = vsel %vm140, %v152, %v119
      %v159 = vsel %vm141, %v152, %v120
      %v160 = vsel %vm142, %v152, %v121
      %v161 = vsel %vm143, %v152, %v122
      %v162 = vsel %vm144, %v152, %v123
      %v163 = vsel %vm145, %v152, %v124
      %v164 = vsel %vm146, %v152, %v125
      %v165 = vsel %vm147, %v152, %v126
      %v166 = vsel %vm148, %v152, %v127
      %v167 = vsel %vm149, %v152, %v128
      %v168 = vsel %vm150, %v152, %v129
    $region38: #{coarse_matching_loss.1} parent=1 // loop_footer
      %s113 = sadd.s32 1, %s109
    $region39: #{coarse_matching_loss.1} parent=1 // loop_footer_branch
      %108 = sbr.rel target = $region35
    $region40: #{coarse_matching_loss.1} parent=1 // loop_exit
      _
    %vm169 = vcmp.gt.f32.partialorder %v114, 0.1
    %vm170 = vcmp.gt.f32.partialorder %v115, 0.1
    %vm171 = vcmp.gt.f32.partialorder %v116, 0.1
    %vm172 = vcmp.gt.f32.partialorder %v117, 0.1
    %vm173 = vcmp.gt.f32.partialorder %v118, 0.1
    %vm174 = vcmp.gt.f32.partialorder %v119, 0.1
    %vm175 = vcmp.gt.f32.partialorder %v120, 0.1
    %vm176 = vcmp.gt.f32.partialorder %v121, 0.1
    %vm177 = vcmp.gt.f32.partialorder %v122, 0.1
    %vm178 = vcmp.gt.f32.partialorder %v123, 0.1
    %vm179 = vcmp.gt.f32.partialorder %v124, 0.1
    %vm180 = vcmp.gt.f32.partialorder %v125, 0.1
    %vm181 = vcmp.gt.f32.partialorder %v126, 0.1
    %vm182 = vcmp.gt.f32.partialorder %v127, 0.1
    %vm183 = vcmp.gt.f32.partialorder %v128, 0.1
    %vm184 = vcmp.gt.f32.partialorder %v129, 0.1
    %vm185 = vcmp.eq.f32.partialorder %v114, 0.0
    %vm186 = vcmp.eq.f32.partialorder %v115, 0.0
    %vm187 = vcmp.eq.f32.partialorder %v116, 0.0
    %vm188 = vcmp.eq.f32.partialorder %v117, 0.0
    %vm189 = vcmp.eq.f32.partialorder %v118, 0.0
    %vm190 = vcmp.eq.f32.partialorder %v119, 0.0
    %vm191 = vcmp.eq.f32.partialorder %v120, 0.0
    %vm192 = vcmp.eq.f32.partialorder %v121, 0.0
    %vm193 = vcmp.eq.f32.partialorder %v122, 0.0
    %vm194 = vcmp.eq.f32.partialorder %v123, 0.0
    %vm195 = vcmp.eq.f32.partialorder %v124, 0.0
    %vm196 = vcmp.eq.f32.partialorder %v125, 0.0
    %vm197 = vcmp.eq.f32.partialorder %v126, 0.0
    %vm198 = vcmp.eq.f32.partialorder %v127, 0.0
    %vm199 = vcmp.eq.f32.partialorder %v128, 0.0
    %vm200 = vcmp.eq.f32.partialorder %v129, 0.0
    %v201 = vsel %vm169, %v114, 0.0
    %v202 = vsel %vm170, %v115, 0.0
    %v203 = vsel %vm171, %v116, 0.0
    %v204 = vsel %vm172, %v117, 0.0
    %v205 = vsel %vm173, %v118, 0.0
    %v206 = vsel %vm174, %v119, 0.0
    %v207 = vsel %vm175, %v120, 0.0
    %v208 = vsel %vm176, %v121, 0.0
    %v209 = vsel %vm177, %v122, 0.0
    %v210 = vsel %vm178, %v123, 0.0
    %v211 = vsel %vm179, %v124, 0.0
    %v212 = vsel %vm180, %v125, 0.0
    %v213 = vsel %vm181, %v126, 0.0
    %v214 = vsel %vm182, %v127, 0.0
    %v215 = vsel %vm183, %v128, 0.0
    %v216 = vsel %vm184, %v129, 0.0
    %v217 = vrsqrt.pop %v201
    %v218 = vmul.f32 %v201, %v217
    %vm219 = vcmp.eq.f32.partialorder %v201, inf
    %v220 = vsel %vm219, %v201, %v218
    %vm221 = vcmp.eq.f32.partialorder %v201, 0.0
    %v222 = vand.u32 %v201, 2147483648
    %v223 = vsel %vm221, %v222, %v220
    %v224 = vrsqrt.pop %v202
    %v225 = vmul.f32 %v202, %v224
    %vm226 = vcmp.eq.f32.partialorder %v202, inf
    %v227 = vsel %vm226, %v202, %v225
    %vm228 = vcmp.eq.f32.partialorder %v202, 0.0
    %v229 = vand.u32 %v202, 2147483648
    %v230 = vsel %vm228, %v229, %v227
    %v231 = vrsqrt.pop %v203
    %v232 = vmul.f32 %v203, %v231
    %vm233 = vcmp.eq.f32.partialorder %v203, inf
    %v234 = vsel %vm233, %v203, %v232
    %vm235 = vcmp.eq.f32.partialorder %v203, 0.0
    %v236 = vand.u32 %v203, 2147483648
    %v237 = vsel %vm235, %v236, %v234
    %v238 = vrsqrt.pop %v204
    %v239 = vmul.f32 %v204, %v238
    %vm240 = vcmp.eq.f32.partialorder %v204, inf
    %v241 = vsel %vm240, %v204, %v239
    %vm242 = vcmp.eq.f32.partialorder %v204, 0.0
    %v243 = vand.u32 %v204, 2147483648
    %v244 = vsel %vm242, %v243, %v241
    %v245 = vrsqrt.pop %v205
    %v246 = vmul.f32 %v205, %v245
    %vm247 = vcmp.eq.f32.partialorder %v205, inf
    %v248 = vsel %vm247, %v205, %v246
    %vm249 = vcmp.eq.f32.partialorder %v205, 0.0
    %v250 = vand.u32 %v205, 2147483648
    %v251 = vsel %vm249, %v250, %v248
    %v252 = vrsqrt.pop %v206
    %v253 = vmul.f32 %v206, %v252
    %vm254 = vcmp.eq.f32.partialorder %v206, inf
    %v255 = vsel %vm254, %v206, %v253
    %vm256 = vcmp.eq.f32.partialorder %v206, 0.0
    %v257 = vand.u32 %v206, 2147483648
    %v258 = vsel %vm256, %v257, %v255
    %v259 = vrsqrt.pop %v207
    %v260 = vmul.f32 %v207, %v259
    %vm261 = vcmp.eq.f32.partialorder %v207, inf
    %v262 = vsel %vm261, %v207, %v260
    %vm263 = vcmp.eq.f32.partialorder %v207, 0.0
    %v264 = vand.u32 %v207, 2147483648
    %v265 = vsel %vm263, %v264, %v262
    %v266 = vrsqrt.pop %v208
    %v267 = vmul.f32 %v208, %v266
    %vm268 = vcmp.eq.f32.partialorder %v208, inf
    %v269 = vsel %vm268, %v208, %v267
    %vm270 = vcmp.eq.f32.partialorder %v208, 0.0
    %v271 = vand.u32 %v208, 2147483648
    %v272 = vsel %vm270, %v271, %v269
    %v273 = vrsqrt.pop %v209
    %v274 = vmul.f32 %v209, %v273
    %vm275 = vcmp.eq.f32.partialorder %v209, inf
    %v276 = vsel %vm275, %v209, %v274
    %vm277 = vcmp.eq.f32.partialorder %v209, 0.0
    %v278 = vand.u32 %v209, 2147483648
    %v279 = vsel %vm277, %v278, %v276
    %v280 = vrsqrt.pop %v210
    %v281 = vmul.f32 %v210, %v280
    %vm282 = vcmp.eq.f32.partialorder %v210, inf
    %v283 = vsel %vm282, %v210, %v281
    %vm284 = vcmp.eq.f32.partialorder %v210, 0.0
    %v285 = vand.u32 %v210, 2147483648
    %v286 = vsel %vm284, %v285, %v283
    %v287 = vrsqrt.pop %v211
    %v288 = vmul.f32 %v211, %v287
    %vm289 = vcmp.eq.f32.partialorder %v211, inf
    %v290 = vsel %vm289, %v211, %v288
    %vm291 = vcmp.eq.f32.partialorder %v211, 0.0
    %v292 = vand.u32 %v211, 2147483648
    %v293 = vsel %vm291, %v292, %v290
    %v294 = vrsqrt.pop %v212
    %v295 = vmul.f32 %v212, %v294
    %vm296 = vcmp.eq.f32.partialorder %v212, inf
    %v297 = vsel %vm296, %v212, %v295
    %vm298 = vcmp.eq.f32.partialorder %v212, 0.0
    %v299 = vand.u32 %v212, 2147483648
    %v300 = vsel %vm298, %v299, %v297
    %v301 = vrsqrt.pop %v213
    %v302 = vmul.f32 %v213, %v301
    %vm303 = vcmp.eq.f32.partialorder %v213, inf
    %v304 = vsel %vm303, %v213, %v302
    %vm305 = vcmp.eq.f32.partialorder %v213, 0.0
    %v306 = vand.u32 %v213, 2147483648
    %v307 = vsel %vm305, %v306, %v304
    %v308 = vrsqrt.pop %v214
    %v309 = vmul.f32 %v214, %v308
    %vm310 = vcmp.eq.f32.partialorder %v214, inf
    %v311 = vsel %vm310, %v214, %v309
    %vm312 = vcmp.eq.f32.partialorder %v214, 0.0
    %v313 = vand.u32 %v214, 2147483648
    %v314 = vsel %vm312, %v313, %v311
    %v315 = vrsqrt.pop %v215
    %v316 = vmul.f32 %v215, %v315
    %vm317 = vcmp.eq.f32.partialorder %v215, inf
    %v318 = vsel %vm317, %v215, %v316
    %vm319 = vcmp.eq.f32.partialorder %v215, 0.0
    %v320 = vand.u32 %v215, 2147483648
    %v321 = vsel %vm319, %v320, %v318
    %v322 = vrsqrt.pop %v216
    %v323 = vmul.f32 %v216, %v322
    %vm324 = vcmp.eq.f32.partialorder %v216, inf
    %v325 = vsel %vm324, %v216, %v323
    %vm326 = vcmp.eq.f32.partialorder %v216, 0.0
    %v327 = vand.u32 %v216, 2147483648
    %v328 = vsel %vm326, %v327, %v325
    %v329 = vsel %vm169, 1.0, 0.0
    %v330 = vsel %vm170, 1.0, 0.0
    %v331 = vsel %vm171, 1.0, 0.0
    %v332 = vsel %vm172, 1.0, 0.0
    %v333 = vsel %vm173, 1.0, 0.0
    %v334 = vsel %vm174, 1.0, 0.0
    %v335 = vsel %vm175, 1.0, 0.0
    %v336 = vsel %vm176, 1.0, 0.0
    %v337 = vsel %vm177, 1.0, 0.0
    %v338 = vsel %vm178, 1.0, 0.0
    %v339 = vsel %vm179, 1.0, 0.0
    %v340 = vsel %vm180, 1.0, 0.0
    %v341 = vsel %vm181, 1.0, 0.0
    %v342 = vsel %vm182, 1.0, 0.0
    %v343 = vsel %vm183, 1.0, 0.0
    %v344 = vsel %vm184, 1.0, 0.0
    %345 = vmax.xlane.f32.xlu0 %v329
    %v346 = vpop.xlane.xlu0 %345
    %347 = vmax.xlane.f32.xlu0 %v330
    %v348 = vpop.xlane.xlu0 %347
    %349 = vmax.xlane.f32.xlu0 %v331
    %v350 = vpop.xlane.xlu0 %349
    %351 = vmax.xlane.f32.xlu0 %v332
    %v352 = vpop.xlane.xlu0 %351
    %353 = vmax.xlane.f32.xlu0 %v333
    %v354 = vpop.xlane.xlu0 %353
    %355 = vmax.xlane.f32.xlu0 %v334
    %v356 = vpop.xlane.xlu0 %355
    %357 = vmax.xlane.f32.xlu0 %v335
    %v358 = vpop.xlane.xlu0 %357
    %359 = vmax.xlane.f32.xlu0 %v336
    %v360 = vpop.xlane.xlu0 %359
    %361 = vmax.xlane.f32.xlu0 %v337
    %v362 = vpop.xlane.xlu0 %361
    %363 = vmax.xlane.f32.xlu0 %v338
    %v364 = vpop.xlane.xlu0 %363
    %365 = vmax.xlane.f32.xlu0 %v339
    %v366 = vpop.xlane.xlu0 %365
    %367 = vmax.xlane.f32.xlu0 %v340
    %v368 = vpop.xlane.xlu0 %367
    %369 = vmax.xlane.f32.xlu0 %v341
    %v370 = vpop.xlane.xlu0 %369
    %371 = vmax.xlane.f32.xlu0 %v342
    %v372 = vpop.xlane.xlu0 %371
    %373 = vmax.xlane.f32.xlu0 %v343
    %v374 = vpop.xlane.xlu0 %373
    %375 = vmax.xlane.f32.xlu0 %v344
    %v376 = vpop.xlane.xlu0 %375
    %vm377 = vcmp.gt.f32.partialorder %v346, 0.0
    %vm378 = vcmp.gt.f32.partialorder %v348, 0.0
    %vm379 = vcmp.gt.f32.partialorder %v350, 0.0
    %vm380 = vcmp.gt.f32.partialorder %v352, 0.0
    %vm381 = vcmp.gt.f32.partialorder %v354, 0.0
    %vm382 = vcmp.gt.f32.partialorder %v356, 0.0
    %vm383 = vcmp.gt.f32.partialorder %v358, 0.0
    %vm384 = vcmp.gt.f32.partialorder %v360, 0.0
    %vm385 = vcmp.gt.f32.partialorder %v362, 0.0
    %vm386 = vcmp.gt.f32.partialorder %v364, 0.0
    %vm387 = vcmp.gt.f32.partialorder %v366, 0.0
    %vm388 = vcmp.gt.f32.partialorder %v368, 0.0
    %vm389 = vcmp.gt.f32.partialorder %v370, 0.0
    %vm390 = vcmp.gt.f32.partialorder %v372, 0.0
    %vm391 = vcmp.gt.f32.partialorder %v374, 0.0
    %vm392 = vcmp.gt.f32.partialorder %v376, 0.0
    %v393 = vsel %vm185, 1.0, 0.0
    %v394 = vsel %vm186, 1.0, 0.0
    %v395 = vsel %vm187, 1.0, 0.0
    %v396 = vsel %vm188, 1.0, 0.0
    %v397 = vsel %vm189, 1.0, 0.0
    %v398 = vsel %vm190, 1.0, 0.0
    %v399 = vsel %vm191, 1.0, 0.0
    %v400 = vsel %vm192, 1.0, 0.0
    %v401 = vsel %vm193, 1.0, 0.0
    %v402 = vsel %vm194, 1.0, 0.0
    %v403 = vsel %vm195, 1.0, 0.0
    %v404 = vsel %vm196, 1.0, 0.0
    %v405 = vsel %vm197, 1.0, 0.0
    %v406 = vsel %vm198, 1.0, 0.0
    %v407 = vsel %vm199, 1.0, 0.0
    %v408 = vsel %vm200, 1.0, 0.0
    %409 = vmax.xlane.f32.xlu0 %v393
    %v410 = vpop.xlane.xlu0 %409
    %411 = vmax.xlane.f32.xlu0 %v394
    %v412 = vpop.xlane.xlu0 %411
    %413 = vmax.xlane.f32.xlu0 %v395
    %v414 = vpop.xlane.xlu0 %413
    %415 = vmax.xlane.f32.xlu0 %v396
    %v416 = vpop.xlane.xlu0 %415
    %417 = vmax.xlane.f32.xlu0 %v397
    %v418 = vpop.xlane.xlu0 %417
    %419 = vmax.xlane.f32.xlu0 %v398
    %v420 = vpop.xlane.xlu0 %419
    %421 = vmax.xlane.f32.xlu0 %v399
    %v422 = vpop.xlane.xlu0 %421
    %423 = vmax.xlane.f32.xlu0 %v400
    %v424 = vpop.xlane.xlu0 %423
    %425 = vmax.xlane.f32.xlu0 %v401
    %v426 = vpop.xlane.xlu0 %425
    %427 = vmax.xlane.f32.xlu0 %v402
    %v428 = vpop.xlane.xlu0 %427
    %429 = vmax.xlane.f32.xlu0 %v403
    %v430 = vpop.xlane.xlu0 %429
    %431 = vmax.xlane.f32.xlu0 %v404
    %v432 = vpop.xlane.xlu0 %431
    %433 = vmax.xlane.f32.xlu0 %v405
    %v434 = vpop.xlane.xlu0 %433
    %435 = vmax.xlane.f32.xlu0 %v406
    %v436 = vpop.xlane.xlu0 %435
    %437 = vmax.xlane.f32.xlu0 %v407
    %v438 = vpop.xlane.xlu0 %437
    %439 = vmax.xlane.f32.xlu0 %v408
    %v440 = vpop.xlane.xlu0 %439
    %vm441 = vcmp.gt.f32.partialorder %v410, 0.0
    %vm442 = vcmp.gt.f32.partialorder %v412, 0.0
    %vm443 = vcmp.gt.f32.partialorder %v414, 0.0
    %vm444 = vcmp.gt.f32.partialorder %v416, 0.0
    %vm445 = vcmp.gt.f32.partialorder %v418, 0.0
    %vm446 = vcmp.gt.f32.partialorder %v420, 0.0
    %vm447 = vcmp.gt.f32.partialorder %v422, 0.0
    %vm448 = vcmp.gt.f32.partialorder %v424, 0.0
    %vm449 = vcmp.gt.f32.partialorder %v426, 0.0
    %vm450 = vcmp.gt.f32.partialorder %v428, 0.0
    %vm451 = vcmp.gt.f32.partialorder %v430, 0.0
    %vm452 = vcmp.gt.f32.partialorder %v432, 0.0
    %vm453 = vcmp.gt.f32.partialorder %v434, 0.0
    %vm454 = vcmp.gt.f32.partialorder %v436, 0.0
    %vm455 = vcmp.gt.f32.partialorder %v438, 0.0
    %vm456 = vcmp.gt.f32.partialorder %v440, 0.0
    %vm457 = vmand %vm377, %vm441
    %vm458 = vmand %vm378, %vm442
    %vm459 = vmand %vm379, %vm443
    %vm460 = vmand %vm380, %vm444
    %vm461 = vmand %vm381, %vm445
    %vm462 = vmand %vm382, %vm446
    %vm463 = vmand %vm383, %vm447
    %vm464 = vmand %vm384, %vm448
    %vm465 = vmand %vm385, %vm449
    %vm466 = vmand %vm386, %vm450
    %vm467 = vmand %vm387, %vm451
    %vm468 = vmand %vm388, %vm452
    %vm469 = vmand %vm389, %vm453
    %vm470 = vmand %vm390, %vm454
    %vm471 = vmand %vm391, %vm455
    %vm472 = vmand %vm392, %vm456
    %v473 = vsel %vm457, 1, 0
    %v474 = vsel %vm458, 1, 0
    %v475 = vsel %vm459, 1, 0
    %v476 = vsel %vm460, 1, 0
    %v477 = vsel %vm461, 1, 0
    %v478 = vsel %vm462, 1, 0
    %v479 = vsel %vm463, 1, 0
    %v480 = vsel %vm464, 1, 0
    %v481 = vsel %vm465, 1, 0
    %v482 = vsel %vm466, 1, 0
    %v483 = vsel %vm467, 1, 0
    %v484 = vsel %vm468, 1, 0
    %v485 = vsel %vm469, 1, 0
    %v486 = vsel %vm470, 1, 0
    %v487 = vsel %vm471, 1, 0
    %v488 = vsel %vm472, 1, 0
    %v489 = vcvt.s32.f32 %v473
    %v490 = vcvt.s32.f32 %v474
    %v491 = vcvt.s32.f32 %v475
    %v492 = vcvt.s32.f32 %v476
    %v493 = vcvt.s32.f32 %v477
    %v494 = vcvt.s32.f32 %v478
    %v495 = vcvt.s32.f32 %v479
    %v496 = vcvt.s32.f32 %v480
    %v497 = vcvt.s32.f32 %v481
    %v498 = vcvt.s32.f32 %v482
    %v499 = vcvt.s32.f32 %v483
    %v500 = vcvt.s32.f32 %v484
    %v501 = vcvt.s32.f32 %v485
    %v502 = vcvt.s32.f32 %v486
    %v503 = vcvt.s32.f32 %v487
    %v504 = vcvt.s32.f32 %v488
    %v505 = vmax.f32 %v329, %v333
    %v506 = vmax.f32 %v330, %v334
    %v507 = vmax.f32 %v331, %v335
    %v508 = vmax.f32 %v332, %v336
    %v509 = vmax.f32 %v505, %v337
    %v510 = vmax.f32 %v506, %v338
    %v511 = vmax.f32 %v507, %v339
    %v512 = vmax.f32 %v508, %v340
    %v513 = vmax.f32 %v509, %v341
    %v514 = vmax.f32 %v510, %v342
    %v515 = vmax.f32 %v511, %v343
    %v516 = vmax.f32 %v512, %v344
    %v517 = vmax.f32 %v513, %v514
    %v518 = vmax.f32 %v515, %v516
    %v519 = vmax.f32 %v517, %v518
    %v520 = vrot.slane %v519, 4
    %v521 = vmax.f32 %v519, %v520
    %v522 = vrot.slane %v521, 2
    %v523 = vmax.f32 %v521, %v522
    %v524 = vrot.slane %v523, 1
    %v525 = vmax.f32 %v523, %v524
    %vm526 = vcmp.gt.f32.partialorder %v525, 0.0
    %v527 = vmax.f32 %v393, %v397
    %v528 = vmax.f32 %v394, %v398
    %v529 = vmax.f32 %v395, %v399
    %v530 = vmax.f32 %v396, %v400
    %v531 = vmax.f32 %v527, %v401
    %v532 = vmax.f32 %v528, %v402
    %v533 = vmax.f32 %v529, %v403
    %v534 = vmax.f32 %v530, %v404
    %v535 = vmax.f32 %v531, %v405
    %v536 = vmax.f32 %v532, %v406
    %v537 = vmax.f32 %v533, %v407
    %v538 = vmax.f32 %v534, %v408
    %v539 = vmax.f32 %v535, %v536
    %v540 = vmax.f32 %v537, %v538
    %v541 = vmax.f32 %v539, %v540
    %v542 = vrot.slane %v541, 4
    %v543 = vmax.f32 %v541, %v542
    %v544 = vrot.slane %v543, 2
    %v545 = vmax.f32 %v543, %v544
    %v546 = vrot.slane %v545, 1
    %v547 = vmax.f32 %v545, %v546
    %vm548 = vcmp.gt.f32.partialorder %v547, 0.0
    %vm549 = vmand %vm526, %vm548
    %v550 = vsel %vm549, 1, 0
    %v551 = vcvt.s32.f32 %v550
    %v552 = vld [vmem:[%s3] sm:$0xff]
    %v553 = vld [vmem:[%s3 + $0x8] sm:$0xff]
    %v554 = vld [vmem:[%s3 + $0x10] sm:$0xff]
    %v555 = vld [vmem:[%s3 + $0x18] sm:$0xff]
    %v556 = vld [vmem:[%s3 + $0x20] sm:$0xff]
    %v557 = vld [vmem:[%s3 + $0x28] sm:$0xff]
    %v558 = vld [vmem:[%s3 + $0x30] sm:$0xff]
    %v559 = vld [vmem:[%s3 + $0x38] sm:$0xff]
    %v560 = vld [vmem:[%s3 + $0x40] sm:$0xff]
    %v561 = vld [vmem:[%s3 + $0x48] sm:$0xff]
    %v562 = vld [vmem:[%s3 + $0x50] sm:$0xff]
    %v563 = vld [vmem:[%s3 + $0x58] sm:$0xff]
    %v564 = vld [vmem:[%s3 + $0x60] sm:$0xff]
    %v565 = vld [vmem:[%s3 + $0x68] sm:$0xff]
    %v566 = vld [vmem:[%s3 + $0x70] sm:$0xff]
    %v567 = vld [vmem:[%s3 + $0x78] sm:$0xff]
    %v568 = vld [vmem:[%s4] sm:$0xff]
    %v569 = vld [vmem:[%s4 + $0x8] sm:$0xff]
    %v570 = vld [vmem:[%s4 + $0x10] sm:$0xff]
    %v571 = vld [vmem:[%s4 + $0x18] sm:$0xff]
    %v572 = vld [vmem:[%s4 + $0x20] sm:$0xff]
    %v573 = vld [vmem:[%s4 + $0x28] sm:$0xff]
    %v574 = vld [vmem:[%s4 + $0x30] sm:$0xff]
    %v575 = vld [vmem:[%s4 + $0x38] sm:$0xff]
    %v576 = vld [vmem:[%s4 + $0x40] sm:$0xff]
    %v577 = vld [vmem:[%s4 + $0x48] sm:$0xff]
    %v578 = vld [vmem:[%s4 + $0x50] sm:$0xff]
    %v579 = vld [vmem:[%s4 + $0x58] sm:$0xff]
    %v580 = vld [vmem:[%s4 + $0x60] sm:$0xff]
    %v581 = vld [vmem:[%s4 + $0x68] sm:$0xff]
    %v582 = vld [vmem:[%s4 + $0x70] sm:$0xff]
    %v583 = vld [vmem:[%s4 + $0x78] sm:$0xff]
    %vm584 = vcmask 261120
    %v586 = vsel %vm584, %v552, 0
    %v589 = vsel %vm584, %v553, 0
    %v592 = vsel %vm584, %v554, 0
    %v595 = vsel %vm584, %v555, 0
    %v598 = vsel %vm584, %v556, 0
    %v601 = vsel %vm584, %v557, 0
    %v604 = vsel %vm584, %v558, 0
    %v607 = vsel %vm584, %v559, 0
    %v610 = vsel %vm584, %v560, 0
    %v613 = vsel %vm584, %v561, 0
    %v616 = vsel %vm584, %v562, 0
    %v619 = vsel %vm584, %v563, 0
    %v622 = vsel %vm584, %v564, 0
    %v625 = vsel %vm584, %v565, 0
    %v628 = vsel %vm584, %v566, 0
    %v631 = vsel %vm584, %v567, 0
    %v634 = vsel %vm584, %v568, 0
    %v637 = vsel %vm584, %v569, 0
    %v640 = vsel %vm584, %v570, 0
    %v643 = vsel %vm584, %v571, 0
    %v646 = vsel %vm584, %v572, 0
    %v649 = vsel %vm584, %v573, 0
    %v652 = vsel %vm584, %v574, 0
    %v655 = vsel %vm584, %v575, 0
    %v658 = vsel %vm584, %v576, 0
    %v661 = vsel %vm584, %v577, 0
    %v664 = vsel %vm584, %v578, 0
    %v667 = vsel %vm584, %v579, 0
    %v670 = vsel %vm584, %v580, 0
    %v673 = vsel %vm584, %v581, 0
    %v676 = vsel %vm584, %v582, 0
    %v679 = vsel %vm584, %v583, 0
    %681 = vmatprep.subr.mxu0 0.0
    %682 = vmatpush1.xpose.msra.mxu0 %v634
    %683 = vmatprep.subr.mxu0 0.0
    %684 = vmatpush1.xpose.msra.mxu0 %v637
    %685 = vmatprep.subr.mxu0 0.0
    %686 = vmatpush1.xpose.msra.mxu0 %v640
    %687 = vmatprep.subr.mxu0 0.0
    %688 = vmatpush1.xpose.msra.mxu0 %v643
    %689 = vmatprep.subr.mxu0 0.0
    %690 = vmatpush1.xpose.msra.mxu0 %v646
    %691 = vmatprep.subr.mxu0 0.0
    %692 = vmatpush1.xpose.msra.mxu0 %v649
    %693 = vmatprep.subr.mxu0 0.0
    %694 = vmatpush1.xpose.msra.mxu0 %v652
    %695 = vmatprep.subr.mxu0 0.0
    %696 = vmatpush1.xpose.msra.mxu0 %v655
    %697 = vmatprep.subr.mxu0 0.0
    %698 = vmatpush1.xpose.msra.mxu0 %v658
    %699 = vmatprep.subr.mxu0 0.0
    %700 = vmatpush1.xpose.msra.mxu0 %v661
    %701 = vmatprep.subr.mxu0 0.0
    %702 = vmatpush1.xpose.msra.mxu0 %v664
    %703 = vmatprep.subr.mxu0 0.0
    %704 = vmatpush1.xpose.msra.mxu0 %v667
    %705 = vmatprep.subr.mxu0 0.0
    %706 = vmatpush1.xpose.msra.mxu0 %v670
    %707 = vmatprep.subr.mxu0 0.0
    %708 = vmatpush1.xpose.msra.mxu0 %v673
    %709 = vmatprep.subr.mxu0 0.0
    %710 = vmatpush1.xpose.msra.mxu0 %v676
    %711 = vmatprep.subr.mxu0 0.0
    %712 = vmatpush1.xpose.msra.mxu0 %v679
    %713 = vmatprep.subr.mxu0 0.0
    %714 = vmatpush1.xpose.msra.mxu0 0.0
    %715 = vmatprep.subr.mxu0 0.0
    %716 = vmatpush1.xpose.msra.mxu0 0.0
    %717 = vmatprep.subr.mxu0 0.0
    %718 = vmatpush1.xpose.msra.mxu0 0.0
    %719 = vmatprep.subr.mxu0 0.0
    %720 = vmatpush1.xpose.msra.mxu0 0.0
    %721 = vmatprep.subr.mxu0 0.0
    %722 = vmatpush1.xpose.msra.mxu0 0.0
    %723 = vmatprep.subr.mxu0 0.0
    %724 = vmatpush1.xpose.msra.mxu0 0.0
    %725 = vmatprep.subr.mxu0 0.0
    %726 = vmatpush1.xpose.msra.mxu0 0.0
    %727 = vmatprep.subr.mxu0 0.0
    %728 = vmatpush1.xpose.msra.mxu0 0.0
    %729 = vmatprep.subr.mxu0 0.0
    %730 = vmatpush1.xpose.msra.mxu0 0.0
    %731 = vmatprep.subr.mxu0 0.0
    %732 = vmatpush1.xpose.msra.mxu0 0.0
    %733 = vmatprep.subr.mxu0 0.0
    %734 = vmatpush1.xpose.msra.mxu0 0.0
    %735 = vmatprep.subr.mxu0 0.0
    %736 = vmatpush1.xpose.msra.mxu0 0.0
    %737 = vmatprep.subr.mxu0 0.0
    %738 = vmatpush1.xpose.msra.mxu0 0.0
    %739 = vmatprep.subr.mxu0 0.0
    %740 = vmatpush1.xpose.msra.mxu0 0.0
    %741 = vmatprep.subr.mxu0 0.0
    %742 = vmatpush1.xpose.msra.mxu0 0.0
    %743 = vmatprep.subr.mxu0 0.0
    %744 = vmatpush1.xpose.msra.mxu0 0.0
    %745 = vmatprep.mubr.f32.mxu0 0.0
    %746 = vmatmul.mubr.f32.gmra.mrb[0].mxu0 %v586
    %v747 = vpop.f32.mrb[0].mxu0
    %v748 = vadd.f32 0.0, %v747
    %v749 = vpop.f32.mrb[0].mxu0
    %750 = vmatprep.mubr.f32.mxu0 0.0
    %751 = vmatmul.mubr.f32.gmra.mrb[0].mxu0 %v589
    %v752 = vpop.f32.mrb[0].mxu0
    %v753 = vadd.f32 0.0, %v752
    %v754 = vpop.f32.mrb[0].mxu0
    %755 = vmatprep.mubr.f32.mxu0 0.0
    %756 = vmatmul.mubr.f32.gmra.mrb[0].mxu0 %v592
    %v757 = vpop.f32.mrb[0].mxu0
    %v758 = vadd.f32 0.0, %v757
    %v759 = vpop.f32.mrb[0].mxu0
    %760 = vmatprep.mubr.f32.mxu0 0.0
    %761 = vmatmul.mubr.f32.gmra.mrb[0].mxu0 %v595
    %v762 = vpop.f32.mrb[0].mxu0
    %v763 = vadd.f32 0.0, %v762
    %v764 = vpop.f32.mrb[0].mxu0
    %765 = vmatprep.mubr.f32.mxu0 0.0
    %766 = vmatmul.mubr.f32.gmra.mrb[0].mxu0 %v598
    %v767 = vpop.f32.mrb[0].mxu0
    %v768 = vadd.f32 0.0, %v767
    %v769 = vpop.f32.mrb[0].mxu0
    %770 = vmatprep.mubr.f32.mxu0 0.0
    %771 = vmatmul.mubr.f32.gmra.mrb[0].mxu0 %v601
    %v772 = vpop.f32.mrb[0].mxu0
    %v773 = vadd.f32 0.0, %v772
    %v774 = vpop.f32.mrb[0].mxu0
    %775 = vmatprep.mubr.f32.mxu0 0.0
    %776 = vmatmul.mubr.f32.gmra.mrb[0].mxu0 %v604
    %v777 = vpop.f32.mrb[0].mxu0
    %v778 = vadd.f32 0.0, %v777
    %v779 = vpop.f32.mrb[0].mxu0
    %780 = vmatprep.mubr.f32.mxu0 0.0
    %781 = vmatmul.mubr.f32.gmra.mrb[0].mxu0 %v607
    %v782 = vpop.f32.mrb[0].mxu0
    %v783 = vadd.f32 0.0, %v782
    %v784 = vpop.f32.mrb[0].mxu0
    %785 = vmatprep.mubr.f32.mxu0 0.0
    %786 = vmatmul.mubr.f32.gmra.mrb[0].mxu0 %v610
    %v787 = vpop.f32.mrb[0].mxu0
    %v788 = vadd.f32 0.0, %v787
    %v789 = vpop.f32.mrb[0].mxu0
    %790 = vmatprep.mubr.f32.mxu0 0.0
    %791 = vmatmul.mubr.f32.gmra.mrb[0].mxu0 %v613
    %v792 = vpop.f32.mrb[0].mxu0
    %v793 = vadd.f32 0.0, %v792
    %v794 = vpop.f32.mrb[0].mxu0
    %795 = vmatprep.mubr.f32.mxu0 0.0
    %796 = vmatmul.mubr.f32.gmra.mrb[0].mxu0 %v616
    %v797 = vpop.f32.mrb[0].mxu0
    %v798 = vadd.f32 0.0, %v797
    %v799 = vpop.f32.mrb[0].mxu0
    %800 = vmatprep.mubr.f32.mxu0 0.0
    %801 = vmatmul.mubr.f32.gmra.mrb[0].mxu0 %v619
    %v802 = vpop.f32.mrb[0].mxu0
    %v803 = vadd.f32 0.0, %v802
    %v804 = vpop.f32.mrb[0].mxu0
    %805 = vmatprep.mubr.f32.mxu0 0.0
    %806 = vmatmul.mubr.f32.gmra.mrb[0].mxu0 %v622
    %v807 = vpop.f32.mrb[0].mxu0
    %v808 = vadd.f32 0.0, %v807
    %v809 = vpop.f32.mrb[0].mxu0
    %810 = vmatprep.mubr.f32.mxu0 0.0
    %811 = vmatmul.mubr.f32.gmra.mrb[0].mxu0 %v625
    %v812 = vpop.f32.mrb[0].mxu0
    %v813 = vadd.f32 0.0, %v812
    %v814 = vpop.f32.mrb[0].mxu0
    %815 = vmatprep.mubr.f32.mxu0 0.0
    %816 = vmatmul.mubr.f32.gmra.mrb[0].mxu0 %v628
    %v817 = vpop.f32.mrb[0].mxu0
    %v818 = vadd.f32 0.0, %v817
    %v819 = vpop.f32.mrb[0].mxu0
    %820 = vmatprep.mubr.f32.mxu0 0.0
    %821 = vmatmul.mubr.f32.gmra.mrb[0].mxu0 %v631
    %v822 = vpop.f32.mrb[0].mxu0
    %v823 = vadd.f32 0.0, %v822
    %v824 = vpop.f32.mrb[0].mxu0
    %825 = vdwg.mxu0
    %v826 = vmul.f32 %v748, 2.0
    %v827 = vmul.f32 %v753, 2.0
    %v828 = vmul.f32 %v758, 2.0
    %v829 = vmul.f32 %v763, 2.0
    %v830 = vmul.f32 %v768, 2.0
    %v831 = vmul.f32 %v773, 2.0
    %v832 = vmul.f32 %v778, 2.0
    %v833 = vmul.f32 %v783, 2.0
    %v834 = vmul.f32 %v788, 2.0
    %v835 = vmul.f32 %v793, 2.0
    %v836 = vmul.f32 %v798, 2.0
    %v837 = vmul.f32 %v803, 2.0
    %v838 = vmul.f32 %v808, 2.0
    %v839 = vmul.f32 %v813, 2.0
    %v840 = vmul.f32 %v818, 2.0
    %v841 = vmul.f32 %v823, 2.0
    %v842 = vsub.f32 2.0, %v826
    %v843 = vsub.f32 2.0, %v827
    %v844 = vsub.f32 2.0, %v828
    %v845 = vsub.f32 2.0, %v829
    %v846 = vsub.f32 2.0, %v830
    %v847 = vsub.f32 2.0, %v831
    %v848 = vsub.f32 2.0, %v832
    %v849 = vsub.f32 2.0, %v833
    %v850 = vsub.f32 2.0, %v834
    %v851 = vsub.f32 2.0, %v835
    %v852 = vsub.f32 2.0, %v836
    %v853 = vsub.f32 2.0, %v837
    %v854 = vsub.f32 2.0, %v838
    %v855 = vsub.f32 2.0, %v839
    %v856 = vsub.f32 2.0, %v840
    %v857 = vsub.f32 2.0, %v841
    %v858 = vmax.f32 %v842, 0.0
    %v859 = vmax.f32 %v843, 0.0
    %v860 = vmax.f32 %v844, 0.0
    %v861 = vmax.f32 %v845, 0.0
    %v862 = vmax.f32 %v846, 0.0
    %v863 = vmax.f32 %v847, 0.0
    %v864 = vmax.f32 %v848, 0.0
    %v865 = vmax.f32 %v849, 0.0
    %v866 = vmax.f32 %v850, 0.0
    %v867 = vmax.f32 %v851, 0.0
    %v868 = vmax.f32 %v852, 0.0
    %v869 = vmax.f32 %v853, 0.0
    %v870 = vmax.f32 %v854, 0.0
    %v871 = vmax.f32 %v855, 0.0
    %v872 = vmax.f32 %v856, 0.0
    %v873 = vmax.f32 %v857, 0.0
    %v874 = vrsqrt.pop %v858
    %v875 = vmul.f32 %v858, %v874
    %vm876 = vcmp.eq.f32.partialorder %v858, inf
    %v877 = vsel %vm876, %v858, %v875
    %vm878 = vcmp.eq.f32.partialorder %v858, 0.0
    %v879 = vand.u32 %v858, 2147483648
    %v880 = vsel %vm878, %v879, %v877
    %v881 = vrsqrt.pop %v859
    %v882 = vmul.f32 %v859, %v881
    %vm883 = vcmp.eq.f32.partialorder %v859, inf
    %v884 = vsel %vm883, %v859, %v882
    %vm885 = vcmp.eq.f32.partialorder %v859, 0.0
    %v886 = vand.u32 %v859, 2147483648
    %v887 = vsel %vm885, %v886, %v884
    %v888 = vrsqrt.pop %v860
    %v889 = vmul.f32 %v860, %v888
    %vm890 = vcmp.eq.f32.partialorder %v860, inf
    %v891 = vsel %vm890, %v860, %v889
    %vm892 = vcmp.eq.f32.partialorder %v860, 0.0
    %v893 = vand.u32 %v860, 2147483648
    %v894 = vsel %vm892, %v893, %v891
    %v895 = vrsqrt.pop %v861
    %v896 = vmul.f32 %v861, %v895
    %vm897 = vcmp.eq.f32.partialorder %v861, inf
    %v898 = vsel %vm897, %v861, %v896
    %vm899 = vcmp.eq.f32.partialorder %v861, 0.0
    %v900 = vand.u32 %v861, 2147483648
    %v901 = vsel %vm899, %v900, %v898
    %v902 = vrsqrt.pop %v862
    %v903 = vmul.f32 %v862, %v902
    %vm904 = vcmp.eq.f32.partialorder %v862, inf
    %v905 = vsel %vm904, %v862, %v903
    %vm906 = vcmp.eq.f32.partialorder %v862, 0.0
    %v907 = vand.u32 %v862, 2147483648
    %v908 = vsel %vm906, %v907, %v905
    %v909 = vrsqrt.pop %v863
    %v910 = vmul.f32 %v863, %v909
    %vm911 = vcmp.eq.f32.partialorder %v863, inf
    %v912 = vsel %vm911, %v863, %v910
    %vm913 = vcmp.eq.f32.partialorder %v863, 0.0
    %v914 = vand.u32 %v863, 2147483648
    %v915 = vsel %vm913, %v914, %v912
    %v916 = vrsqrt.pop %v864
    %v917 = vmul.f32 %v864, %v916
    %vm918 = vcmp.eq.f32.partialorder %v864, inf
    %v919 = vsel %vm918, %v864, %v917
    %vm920 = vcmp.eq.f32.partialorder %v864, 0.0
    %v921 = vand.u32 %v864, 2147483648
    %v922 = vsel %vm920, %v921, %v919
    %v923 = vrsqrt.pop %v865
    %v924 = vmul.f32 %v865, %v923
    %vm925 = vcmp.eq.f32.partialorder %v865, inf
    %v926 = vsel %vm925, %v865, %v924
    %vm927 = vcmp.eq.f32.partialorder %v865, 0.0
    %v928 = vand.u32 %v865, 2147483648
    %v929 = vsel %vm927, %v928, %v926
    %v930 = vrsqrt.pop %v866
    %v931 = vmul.f32 %v866, %v930
    %vm932 = vcmp.eq.f32.partialorder %v866, inf
    %v933 = vsel %vm932, %v866, %v931
    %vm934 = vcmp.eq.f32.partialorder %v866, 0.0
    %v935 = vand.u32 %v866, 2147483648
    %v936 = vsel %vm934, %v935, %v933
    %v937 = vrsqrt.pop %v867
    %v938 = vmul.f32 %v867, %v937
    %vm939 = vcmp.eq.f32.partialorder %v867, inf
    %v940 = vsel %vm939, %v867, %v938
    %vm941 = vcmp.eq.f32.partialorder %v867, 0.0
    %v942 = vand.u32 %v867, 2147483648
    %v943 = vsel %vm941, %v942, %v940
    %v944 = vrsqrt.pop %v868
    %v945 = vmul.f32 %v868, %v944
    %vm946 = vcmp.eq.f32.partialorder %v868, inf
    %v947 = vsel %vm946, %v868, %v945
    %vm948 = vcmp.eq.f32.partialorder %v868, 0.0
    %v949 = vand.u32 %v868, 2147483648
    %v950 = vsel %vm948, %v949, %v947
    %v951 = vrsqrt.pop %v869
    %v952 = vmul.f32 %v869, %v951
    %vm953 = vcmp.eq.f32.partialorder %v869, inf
    %v954 = vsel %vm953, %v869, %v952
    %vm955 = vcmp.eq.f32.partialorder %v869, 0.0
    %v956 = vand.u32 %v869, 2147483648
    %v957 = vsel %vm955, %v956, %v954
    %v958 = vrsqrt.pop %v870
    %v959 = vmul.f32 %v870, %v958
    %vm960 = vcmp.eq.f32.partialorder %v870, inf
    %v961 = vsel %vm960, %v870, %v959
    %vm962 = vcmp.eq.f32.partialorder %v870, 0.0
    %v963 = vand.u32 %v870, 2147483648
    %v964 = vsel %vm962, %v963, %v961
    %v965 = vrsqrt.pop %v871
    %v966 = vmul.f32 %v871, %v965
    %vm967 = vcmp.eq.f32.partialorder %v871, inf
    %v968 = vsel %vm967, %v871, %v966
    %vm969 = vcmp.eq.f32.partialorder %v871, 0.0
    %v970 = vand.u32 %v871, 2147483648
    %v971 = vsel %vm969, %v970, %v968
    %v972 = vrsqrt.pop %v872
    %v973 = vmul.f32 %v872, %v972
    %vm974 = vcmp.eq.f32.partialorder %v872, inf
    %v975 = vsel %vm974, %v872, %v973
    %vm976 = vcmp.eq.f32.partialorder %v872, 0.0
    %v977 = vand.u32 %v872, 2147483648
    %v978 = vsel %vm976, %v977, %v975
    %v979 = vrsqrt.pop %v873
    %v980 = vmul.f32 %v873, %v979
    %vm981 = vcmp.eq.f32.partialorder %v873, inf
    %v982 = vsel %vm981, %v873, %v980
    %vm983 = vcmp.eq.f32.partialorder %v873, 0.0
    %v984 = vand.u32 %v873, 2147483648
    %v985 = vsel %vm983, %v984, %v982
    %v986 = vsub.f32 %v880, 0.1
    %v987 = vsub.f32 %v887, 0.1
    %v988 = vsub.f32 %v894, 0.1
    %v989 = vsub.f32 %v901, 0.1
    %v990 = vsub.f32 %v908, 0.1
    %v991 = vsub.f32 %v915, 0.1
    %v992 = vsub.f32 %v922, 0.1
    %v993 = vsub.f32 %v929, 0.1
    %v994 = vsub.f32 %v936, 0.1
    %v995 = vsub.f32 %v943, 0.1
    %v996 = vsub.f32 %v950, 0.1
    %v997 = vsub.f32 %v957, 0.1
    %v998 = vsub.f32 %v964, 0.1
    %v999 = vsub.f32 %v971, 0.1
    %v1000 = vsub.f32 %v978, 0.1
    %v1001 = vsub.f32 %v985, 0.1
    %v1002 = vmax.f32 %v986, 0.0
    %v1003 = vmax.f32 %v987, 0.0
    %v1004 = vmax.f32 %v988, 0.0
    %v1005 = vmax.f32 %v989, 0.0
    %v1006 = vmax.f32 %v990, 0.0
    %v1007 = vmax.f32 %v991, 0.0
    %v1008 = vmax.f32 %v992, 0.0
    %v1009 = vmax.f32 %v993, 0.0
    %v1010 = vmax.f32 %v994, 0.0
    %v1011 = vmax.f32 %v995, 0.0
    %v1012 = vmax.f32 %v996, 0.0
    %v1013 = vmax.f32 %v997, 0.0
    %v1014 = vmax.f32 %v998, 0.0
    %v1015 = vmax.f32 %v999, 0.0
    %v1016 = vmax.f32 %v1000, 0.0
    %v1017 = vmax.f32 %v1001, 0.0
    %v1018 = vmul.f32 %v1002, %v223
    %v1019 = vmul.f32 %v1003, %v230
    %v1020 = vmul.f32 %v1004, %v237
    %v1021 = vmul.f32 %v1005, %v244
    %v1022 = vmul.f32 %v1006, %v251
    %v1023 = vmul.f32 %v1007, %v258
    %v1024 = vmul.f32 %v1008, %v265
    %v1025 = vmul.f32 %v1009, %v272
    %v1026 = vmul.f32 %v1010, %v279
    %v1027 = vmul.f32 %v1011, %v286
    %v1028 = vmul.f32 %v1012, %v293
    %v1029 = vmul.f32 %v1013, %v300
    %v1030 = vmul.f32 %v1014, %v307
    %v1031 = vmul.f32 %v1015, %v314
    %v1032 = vmul.f32 %v1016, %v321
    %v1033 = vmul.f32 %v1017, %v328
    %v1034 = vsel %vm169, %v1018, 0.0
    %v1035 = vsel %vm170, %v1019, 0.0
    %v1036 = vsel %vm171, %v1020, 0.0
    %v1037 = vsel %vm172, %v1021, 0.0
    %v1038 = vsel %vm173, %v1022, 0.0
    %v1039 = vsel %vm174, %v1023, 0.0
    %v1040 = vsel %vm175, %v1024, 0.0
    %v1041 = vsel %vm176, %v1025, 0.0
    %v1042 = vsel %vm177, %v1026, 0.0
    %v1043 = vsel %vm178, %v1027, 0.0
    %v1044 = vsel %vm179, %v1028, 0.0
    %v1045 = vsel %vm180, %v1029, 0.0
    %v1046 = vsel %vm181, %v1030, 0.0
    %v1047 = vsel %vm182, %v1031, 0.0
    %v1048 = vsel %vm183, %v1032, 0.0
    %v1049 = vsel %vm184, %v1033, 0.0
    %v1050 = vmul.f32 %v986, 24.0
    %v1051 = vmul.f32 %v987, 24.0
    %v1052 = vmul.f32 %v988, 24.0
    %v1053 = vmul.f32 %v989, 24.0
    %v1054 = vmul.f32 %v990, 24.0
    %v1055 = vmul.f32 %v991, 24.0
    %v1056 = vmul.f32 %v992, 24.0
    %v1057 = vmul.f32 %v993, 24.0
    %v1058 = vmul.f32 %v994, 24.0
    %v1059 = vmul.f32 %v995, 24.0
    %v1060 = vmul.f32 %v996, 24.0
    %v1061 = vmul.f32 %v997, 24.0
    %v1062 = vmul.f32 %v998, 24.0
    %v1063 = vmul.f32 %v999, 24.0
    %v1064 = vmul.f32 %v1000, 24.0
    %v1065 = vmul.f32 %v1001, 24.0
    %v1066 = vmul.f32 %v1050, %v1034
    %v1067 = vmul.f32 %v1051, %v1035
    %v1068 = vmul.f32 %v1052, %v1036
    %v1069 = vmul.f32 %v1053, %v1037
    %v1070 = vmul.f32 %v1054, %v1038
    %v1071 = vmul.f32 %v1055, %v1039
    %v1072 = vmul.f32 %v1056, %v1040
    %v1073 = vmul.f32 %v1057, %v1041
    %v1074 = vmul.f32 %v1058, %v1042
    %v1075 = vmul.f32 %v1059, %v1043
    %v1076 = vmul.f32 %v1060, %v1044
    %v1077 = vmul.f32 %v1061, %v1045
    %v1078 = vmul.f32 %v1062, %v1046
    %v1079 = vmul.f32 %v1063, %v1047
    %v1080 = vmul.f32 %v1064, %v1048
    %v1081 = vmul.f32 %v1065, %v1049
    %v1082 = vmax.f32 %v1066, %v1070
    %v1083 = vmax.f32 %v1067, %v1071
    %v1084 = vmax.f32 %v1068, %v1072
    %v1085 = vmax.f32 %v1069, %v1073
    %v1086 = vmax.f32 %v1082, %v1074
    %v1087 = vmax.f32 %v1083, %v1075
    %v1088 = vmax.f32 %v1084, %v1076
    %v1089 = vmax.f32 %v1085, %v1077
    %v1090 = vmax.f32 %v1086, %v1078
    %v1091 = vmax.f32 %v1087, %v1079
    %v1092 = vmax.f32 %v1088, %v1080
    %v1093 = vmax.f32 %v1089, %v1081
    %v1094 = vmax.f32 %v1090, %v1091
    %v1095 = vmax.f32 %v1092, %v1093
    %v1096 = vmax.f32 %v1094, %v1095
    %1097 = vmax.xlane.f32.xlu0 %v1096
    %v1098 = vpop.xlane.xlu0 %1097
    %v1099 = vrot.slane %v1098, 4
    %v1100 = vmax.f32 %v1098, %v1099
    %v1101 = vrot.slane %v1100, 2
    %v1102 = vmax.f32 %v1100, %v1101
    %v1103 = vrot.slane %v1102, 1
    %v1104 = vmax.f32 %v1102, %v1103
    %s1105 = vtos %v1104
    %v1106 = vstv %s1105
    %v1107 = vsub.f32 %v1066, %v1106
    %v1108 = vsub.f32 %v1067, %v1106
    %v1109 = vsub.f32 %v1068, %v1106
    %v1110 = vsub.f32 %v1069, %v1106
    %v1111 = vsub.f32 %v1070, %v1106
    %v1112 = vsub.f32 %v1071, %v1106
    %v1113 = vsub.f32 %v1072, %v1106
    %v1114 = vsub.f32 %v1073, %v1106
    %v1115 = vsub.f32 %v1074, %v1106
    %v1116 = vsub.f32 %v1075, %v1106
    %v1117 = vsub.f32 %v1076, %v1106
    %v1118 = vsub.f32 %v1077, %v1106
    %v1119 = vsub.f32 %v1078, %v1106
    %v1120 = vsub.f32 %v1079, %v1106
    %v1121 = vsub.f32 %v1080, %v1106
    %v1122 = vsub.f32 %v1081, %v1106
    %v1123 = vmul.f32 %v1107, 1.442695
    %v1124 = vpow.pop %v1123
    %v1125 = vmul.f32 %v1108, 1.442695
    %v1126 = vpow.pop %v1125
    %v1127 = vmul.f32 %v1109, 1.442695
    %v1128 = vpow.pop %v1127
    %v1129 = vmul.f32 %v1110, 1.442695
    %v1130 = vpow.pop %v1129
    %v1131 = vmul.f32 %v1111, 1.442695
    %v1132 = vpow.pop %v1131
    %v1133 = vmul.f32 %v1112, 1.442695
    %v1134 = vpow.pop %v1133
    %v1135 = vmul.f32 %v1113, 1.442695
    %v1136 = vpow.pop %v1135
    %v1137 = vmul.f32 %v1114, 1.442695
    %v1138 = vpow.pop %v1137
    %v1139 = vmul.f32 %v1115, 1.442695
    %v1140 = vpow.pop %v1139
    %v1141 = vmul.f32 %v1116, 1.442695
    %v1142 = vpow.pop %v1141
    %v1143 = vmul.f32 %v1117, 1.442695
    %v1144 = vpow.pop %v1143
    %v1145 = vmul.f32 %v1118, 1.442695
    %v1146 = vpow.pop %v1145
    %v1147 = vmul.f32 %v1119, 1.442695
    %v1148 = vpow.pop %v1147
    %v1149 = vmul.f32 %v1120, 1.442695
    %v1150 = vpow.pop %v1149
    %v1151 = vmul.f32 %v1121, 1.442695
    %v1152 = vpow.pop %v1151
    %v1153 = vmul.f32 %v1122, 1.442695
    %v1154 = vpow.pop %v1153
    %1155 = vadd.xlane.f32.xlu0 %v1124
    %v1156 = vpop.xlane.xlu0 %1155
    %1157 = vadd.xlane.f32.xlu0 %v1126
    %v1158 = vpop.xlane.xlu0 %1157
    %1159 = vadd.xlane.f32.xlu0 %v1128
    %v1160 = vpop.xlane.xlu0 %1159
    %1161 = vadd.xlane.f32.xlu0 %v1130
    %v1162 = vpop.xlane.xlu0 %1161
    %1163 = vadd.xlane.f32.xlu0 %v1132
    %v1164 = vpop.xlane.xlu0 %1163
    %1165 = vadd.xlane.f32.xlu0 %v1134
    %v1166 = vpop.xlane.xlu0 %1165
    %1167 = vadd.xlane.f32.xlu0 %v1136
    %v1168 = vpop.xlane.xlu0 %1167
    %1169 = vadd.xlane.f32.xlu0 %v1138
    %v1170 = vpop.xlane.xlu0 %1169
    %1171 = vadd.xlane.f32.xlu0 %v1140
    %v1172 = vpop.xlane.xlu0 %1171
    %1173 = vadd.xlane.f32.xlu0 %v1142
    %v1174 = vpop.xlane.xlu0 %1173
    %1175 = vadd.xlane.f32.xlu0 %v1144
    %v1176 = vpop.xlane.xlu0 %1175
    %1177 = vadd.xlane.f32.xlu0 %v1146
    %v1178 = vpop.xlane.xlu0 %1177
    %1179 = vadd.xlane.f32.xlu0 %v1148
    %v1180 = vpop.xlane.xlu0 %1179
    %1181 = vadd.xlane.f32.xlu0 %v1150
    %v1182 = vpop.xlane.xlu0 %1181
    %1183 = vadd.xlane.f32.xlu0 %v1152
    %v1184 = vpop.xlane.xlu0 %1183
    %1185 = vadd.xlane.f32.xlu0 %v1154
    %v1186 = vpop.xlane.xlu0 %1185
    %v1187 = vlog2.pop %v1156
    %v1188 = vmul.f32 %v1187, 0.6931472
    %v1189 = vlog2.pop %v1158
    %v1190 = vmul.f32 %v1189, 0.6931472
    %v1191 = vlog2.pop %v1160
    %v1192 = vmul.f32 %v1191, 0.6931472
    %v1193 = vlog2.pop %v1162
    %v1194 = vmul.f32 %v1193, 0.6931472
    %v1195 = vlog2.pop %v1164
    %v1196 = vmul.f32 %v1195, 0.6931472
    %v1197 = vlog2.pop %v1166
    %v1198 = vmul.f32 %v1197, 0.6931472
    %v1199 = vlog2.pop %v1168
    %v1200 = vmul.f32 %v1199, 0.6931472
    %v1201 = vlog2.pop %v1170
    %v1202 = vmul.f32 %v1201, 0.6931472
    %v1203 = vlog2.pop %v1172
    %v1204 = vmul.f32 %v1203, 0.6931472
    %v1205 = vlog2.pop %v1174
    %v1206 = vmul.f32 %v1205, 0.6931472
    %v1207 = vlog2.pop %v1176
    %v1208 = vmul.f32 %v1207, 0.6931472
    %v1209 = vlog2.pop %v1178
    %v1210 = vmul.f32 %v1209, 0.6931472
    %v1211 = vlog2.pop %v1180
    %v1212 = vmul.f32 %v1211, 0.6931472
    %v1213 = vlog2.pop %v1182
    %v1214 = vmul.f32 %v1213, 0.6931472
    %v1215 = vlog2.pop %v1184
    %v1216 = vmul.f32 %v1215, 0.6931472
    %v1217 = vlog2.pop %v1186
    %v1218 = vmul.f32 %v1217, 0.6931472
    %v1219 = vadd.f32 %v1188, %v1106
    %v1220 = vadd.f32 %v1190, %v1106
    %v1221 = vadd.f32 %v1192, %v1106
    %v1222 = vadd.f32 %v1194, %v1106
    %v1223 = vadd.f32 %v1196, %v1106
    %v1224 = vadd.f32 %v1198, %v1106
    %v1225 = vadd.f32 %v1200, %v1106
    %v1226 = vadd.f32 %v1202, %v1106
    %v1227 = vadd.f32 %v1204, %v1106
    %v1228 = vadd.f32 %v1206, %v1106
    %v1229 = vadd.f32 %v1208, %v1106
    %v1230 = vadd.f32 %v1210, %v1106
    %v1231 = vadd.f32 %v1212, %v1106
    %v1232 = vadd.f32 %v1214, %v1106
    %v1233 = vadd.f32 %v1216, %v1106
    %v1234 = vadd.f32 %v1218, %v1106
    %v1235 = vadd.f32 %v1124, %v1126
    %v1236 = vadd.f32 %v1235, %v1128
    %v1237 = vadd.f32 %v1236, %v1130
    %v1238 = vadd.f32 %v1237, %v1132
    %v1239 = vadd.f32 %v1238, %v1134
    %v1240 = vadd.f32 %v1239, %v1136
    %v1241 = vadd.f32 %v1240, %v1138
    %v1242 = vadd.f32 %v1241, %v1140
    %v1243 = vadd.f32 %v1242, %v1142
    %v1244 = vadd.f32 %v1243, %v1144
    %v1245 = vadd.f32 %v1244, %v1146
    %v1246 = vadd.f32 %v1245, %v1148
    %v1247 = vadd.f32 %v1246, %v1150
    %v1248 = vadd.f32 %v1247, %v1152
    %v1249 = vadd.f32 %v1248, %v1154
    %v1250 = vrot.slane %v1249, 4
    %v1251 = vadd.f32 %v1249, %v1250
    %v1252 = vrot.slane %v1251, 2
    %v1253 = vadd.f32 %v1251, %v1252
    %v1254 = vrot.slane %v1253, 1
    %v1255 = vadd.f32 %v1253, %v1254
    %v1256 = vlog2.pop %v1255
    %v1257 = vmul.f32 %v1256, 0.6931472
    %v1258 = vadd.f32 %v1257, %v1106
    %v1259 = vsub.f32 1.4, %v880
    %v1260 = vsub.f32 1.4, %v887
    %v1261 = vsub.f32 1.4, %v894
    %v1262 = vsub.f32 1.4, %v901
    %v1263 = vsub.f32 1.4, %v908
    %v1264 = vsub.f32 1.4, %v915
    %v1265 = vsub.f32 1.4, %v922
    %v1266 = vsub.f32 1.4, %v929
    %v1267 = vsub.f32 1.4, %v936
    %v1268 = vsub.f32 1.4, %v943
    %v1269 = vsub.f32 1.4, %v950
    %v1270 = vsub.f32 1.4, %v957
    %v1271 = vsub.f32 1.4, %v964
    %v1272 = vsub.f32 1.4, %v971
    %v1273 = vsub.f32 1.4, %v978
    %v1274 = vsub.f32 1.4, %v985
    %v1275 = vmax.f32 %v1259, 0.0
    %v1276 = vmax.f32 %v1260, 0.0
    %v1277 = vmax.f32 %v1261, 0.0
    %v1278 = vmax.f32 %v1262, 0.0
    %v1279 = vmax.f32 %v1263, 0.0
    %v1280 = vmax.f32 %v1264, 0.0
    %v1281 = vmax.f32 %v1265, 0.0
    %v1282 = vmax.f32 %v1266, 0.0
    %v1283 = vmax.f32 %v1267, 0.0
    %v1284 = vmax.f32 %v1268, 0.0
    %v1285 = vmax.f32 %v1269, 0.0
    %v1286 = vmax.f32 %v1270, 0.0
    %v1287 = vmax.f32 %v1271, 0.0
    %v1288 = vmax.f32 %v1272, 0.0
    %v1289 = vmax.f32 %v1273, 0.0
    %v1290 = vmax.f32 %v1274, 0.0
    %v1291 = vsel %vm185, %v1275, 0.0
    %v1292 = vsel %vm186, %v1276, 0.0
    %v1293 = vsel %vm187, %v1277, 0.0
    %v1294 = vsel %vm188, %v1278, 0.0
    %v1295 = vsel %vm189, %v1279, 0.0
    %v1296 = vsel %vm190, %v1280, 0.0
    %v1297 = vsel %vm191, %v1281, 0.0
    %v1298 = vsel %vm192, %v1282, 0.0
    %v1299 = vsel %vm193, %v1283, 0.0
    %v1300 = vsel %vm194, %v1284, 0.0
    %v1301 = vsel %vm195, %v1285, 0.0
    %v1302 = vsel %vm196, %v1286, 0.0
    %v1303 = vsel %vm197, %v1287, 0.0
    %v1304 = vsel %vm198, %v1288, 0.0
    %v1305 = vsel %vm199, %v1289, 0.0
    %v1306 = vsel %vm200, %v1290, 0.0
    %v1307 = vmul.f32 %v1259, 24.0
    %v1308 = vmul.f32 %v1260, 24.0
    %v1309 = vmul.f32 %v1261, 24.0
    %v1310 = vmul.f32 %v1262, 24.0
    %v1311 = vmul.f32 %v1263, 24.0
    %v1312 = vmul.f32 %v1264, 24.0
    %v1313 = vmul.f32 %v1265, 24.0
    %v1314 = vmul.f32 %v1266, 24.0
    %v1315 = vmul.f32 %v1267, 24.0
    %v1316 = vmul.f32 %v1268, 24.0
    %v1317 = vmul.f32 %v1269, 24.0
    %v1318 = vmul.f32 %v1270, 24.0
    %v1319 = vmul.f32 %v1271, 24.0
    %v1320 = vmul.f32 %v1272, 24.0
    %v1321 = vmul.f32 %v1273, 24.0
    %v1322 = vmul.f32 %v1274, 24.0
    %v1323 = vmul.f32 %v1307, %v1291
    %v1324 = vmul.f32 %v1308, %v1292
    %v1325 = vmul.f32 %v1309, %v1293
    %v1326 = vmul.f32 %v1310, %v1294
    %v1327 = vmul.f32 %v1311, %v1295
    %v1328 = vmul.f32 %v1312, %v1296
    %v1329 = vmul.f32 %v1313, %v1297
    %v1330 = vmul.f32 %v1314, %v1298
    %v1331 = vmul.f32 %v1315, %v1299
    %v1332 = vmul.f32 %v1316, %v1300
    %v1333 = vmul.f32 %v1317, %v1301
    %v1334 = vmul.f32 %v1318, %v1302
    %v1335 = vmul.f32 %v1319, %v1303
    %v1336 = vmul.f32 %v1320, %v1304
    %v1337 = vmul.f32 %v1321, %v1305
    %v1338 = vmul.f32 %v1322, %v1306
    %v1339 = vmax.f32 %v1323, %v1327
    %v1340 = vmax.f32 %v1324, %v1328
    %v1341 = vmax.f32 %v1325, %v1329
    %v1342 = vmax.f32 %v1326, %v1330
    %v1343 = vmax.f32 %v1339, %v1331
    %v1344 = vmax.f32 %v1340, %v1332
    %v1345 = vmax.f32 %v1341, %v1333
    %v1346 = vmax.f32 %v1342, %v1334
    %v1347 = vmax.f32 %v1343, %v1335
    %v1348 = vmax.f32 %v1344, %v1336
    %v1349 = vmax.f32 %v1345, %v1337
    %v1350 = vmax.f32 %v1346, %v1338
    %v1351 = vmax.f32 %v1347, %v1348
    %v1352 = vmax.f32 %v1349, %v1350
    %v1353 = vmax.f32 %v1351, %v1352
    %1354 = vmax.xlane.f32.xlu0 %v1353
    %v1355 = vpop.xlane.xlu0 %1354
    %v1356 = vrot.slane %v1355, 4
    %v1357 = vmax.f32 %v1355, %v1356
    %v1358 = vrot.slane %v1357, 2
    %v1359 = vmax.f32 %v1357, %v1358
    %v1360 = vrot.slane %v1359, 1
    %v1361 = vmax.f32 %v1359, %v1360
    %s1362 = vtos %v1361
    %v1363 = vstv %s1362
    %v1364 = vsub.f32 %v1323, %v1363
    %v1365 = vsub.f32 %v1324, %v1363
    %v1366 = vsub.f32 %v1325, %v1363
    %v1367 = vsub.f32 %v1326, %v1363
    %v1368 = vsub.f32 %v1327, %v1363
    %v1369 = vsub.f32 %v1328, %v1363
    %v1370 = vsub.f32 %v1329, %v1363
    %v1371 = vsub.f32 %v1330, %v1363
    %v1372 = vsub.f32 %v1331, %v1363
    %v1373 = vsub.f32 %v1332, %v1363
    %v1374 = vsub.f32 %v1333, %v1363
    %v1375 = vsub.f32 %v1334, %v1363
    %v1376 = vsub.f32 %v1335, %v1363
    %v1377 = vsub.f32 %v1336, %v1363
    %v1378 = vsub.f32 %v1337, %v1363
    %v1379 = vsub.f32 %v1338, %v1363
    %v1380 = vmul.f32 %v1364, 1.442695
    %v1381 = vpow.pop %v1380
    %v1382 = vmul.f32 %v1365, 1.442695
    %v1383 = vpow.pop %v1382
    %v1384 = vmul.f32 %v1366, 1.442695
    %v1385 = vpow.pop %v1384
    %v1386 = vmul.f32 %v1367, 1.442695
    %v1387 = vpow.pop %v1386
    %v1388 = vmul.f32 %v1368, 1.442695
    %v1389 = vpow.pop %v1388
    %v1390 = vmul.f32 %v1369, 1.442695
    %v1391 = vpow.pop %v1390
    %v1392 = vmul.f32 %v1370, 1.442695
    %v1393 = vpow.pop %v1392
    %v1394 = vmul.f32 %v1371, 1.442695
    %v1395 = vpow.pop %v1394
    %v1396 = vmul.f32 %v1372, 1.442695
    %v1397 = vpow.pop %v1396
    %v1398 = vmul.f32 %v1373, 1.442695
    %v1399 = vpow.pop %v1398
    %v1400 = vmul.f32 %v1374, 1.442695
    %v1401 = vpow.pop %v1400
    %v1402 = vmul.f32 %v1375, 1.442695
    %v1403 = vpow.pop %v1402
    %v1404 = vmul.f32 %v1376, 1.442695
    %v1405 = vpow.pop %v1404
    %v1406 = vmul.f32 %v1377, 1.442695
    %v1407 = vpow.pop %v1406
    %v1408 = vmul.f32 %v1378, 1.442695
    %v1409 = vpow.pop %v1408
    %v1410 = vmul.f32 %v1379, 1.442695
    %v1411 = vpow.pop %v1410
    %1412 = vadd.xlane.f32.xlu0 %v1381
    %v1413 = vpop.xlane.xlu0 %1412
    %1414 = vadd.xlane.f32.xlu0 %v1383
    %v1415 = vpop.xlane.xlu0 %1414
    %1416 = vadd.xlane.f32.xlu0 %v1385
    %v1417 = vpop.xlane.xlu0 %1416
    %1418 = vadd.xlane.f32.xlu0 %v1387
    %v1419 = vpop.xlane.xlu0 %1418
    %1420 = vadd.xlane.f32.xlu0 %v1389
    %v1421 = vpop.xlane.xlu0 %1420
    %1422 = vadd.xlane.f32.xlu0 %v1391
    %v1423 = vpop.xlane.xlu0 %1422
    %1424 = vadd.xlane.f32.xlu0 %v1393
    %v1425 = vpop.xlane.xlu0 %1424
    %1426 = vadd.xlane.f32.xlu0 %v1395
    %v1427 = vpop.xlane.xlu0 %1426
    %1428 = vadd.xlane.f32.xlu0 %v1397
    %v1429 = vpop.xlane.xlu0 %1428
    %1430 = vadd.xlane.f32.xlu0 %v1399
    %v1431 = vpop.xlane.xlu0 %1430
    %1432 = vadd.xlane.f32.xlu0 %v1401
    %v1433 = vpop.xlane.xlu0 %1432
    %1434 = vadd.xlane.f32.xlu0 %v1403
    %v1435 = vpop.xlane.xlu0 %1434
    %1436 = vadd.xlane.f32.xlu0 %v1405
    %v1437 = vpop.xlane.xlu0 %1436
    %1438 = vadd.xlane.f32.xlu0 %v1407
    %v1439 = vpop.xlane.xlu0 %1438
    %1440 = vadd.xlane.f32.xlu0 %v1409
    %v1441 = vpop.xlane.xlu0 %1440
    %1442 = vadd.xlane.f32.xlu0 %v1411
    %v1443 = vpop.xlane.xlu0 %1442
    %v1444 = vlog2.pop %v1413
    %v1445 = vmul.f32 %v1444, 0.6931472
    %v1446 = vlog2.pop %v1415
    %v1447 = vmul.f32 %v1446, 0.6931472
    %v1448 = vlog2.pop %v1417
    %v1449 = vmul.f32 %v1448, 0.6931472
    %v1450 = vlog2.pop %v1419
    %v1451 = vmul.f32 %v1450, 0.6931472
    %v1452 = vlog2.pop %v1421
    %v1453 = vmul.f32 %v1452, 0.6931472
    %v1454 = vlog2.pop %v1423
    %v1455 = vmul.f32 %v1454, 0.6931472
    %v1456 = vlog2.pop %v1425
    %v1457 = vmul.f32 %v1456, 0.6931472
    %v1458 = vlog2.pop %v1427
    %v1459 = vmul.f32 %v1458, 0.6931472
    %v1460 = vlog2.pop %v1429
    %v1461 = vmul.f32 %v1460, 0.6931472
    %v1462 = vlog2.pop %v1431
    %v1463 = vmul.f32 %v1462, 0.6931472
    %v1464 = vlog2.pop %v1433
    %v1465 = vmul.f32 %v1464, 0.6931472
    %v1466 = vlog2.pop %v1435
    %v1467 = vmul.f32 %v1466, 0.6931472
    %v1468 = vlog2.pop %v1437
    %v1469 = vmul.f32 %v1468, 0.6931472
    %v1470 = vlog2.pop %v1439
    %v1471 = vmul.f32 %v1470, 0.6931472
    %v1472 = vlog2.pop %v1441
    %v1473 = vmul.f32 %v1472, 0.6931472
    %v1474 = vlog2.pop %v1443
    %v1475 = vmul.f32 %v1474, 0.6931472
    %v1476 = vadd.f32 %v1445, %v1363
    %v1477 = vadd.f32 %v1447, %v1363
    %v1478 = vadd.f32 %v1449, %v1363
    %v1479 = vadd.f32 %v1451, %v1363
    %v1480 = vadd.f32 %v1453, %v1363
    %v1481 = vadd.f32 %v1455, %v1363
    %v1482 = vadd.f32 %v1457, %v1363
    %v1483 = vadd.f32 %v1459, %v1363
    %v1484 = vadd.f32 %v1461, %v1363
    %v1485 = vadd.f32 %v1463, %v1363
    %v1486 = vadd.f32 %v1465, %v1363
    %v1487 = vadd.f32 %v1467, %v1363
    %v1488 = vadd.f32 %v1469, %v1363
    %v1489 = vadd.f32 %v1471, %v1363
    %v1490 = vadd.f32 %v1473, %v1363
    %v1491 = vadd.f32 %v1475, %v1363
    %v1492 = vadd.f32 %v1381, %v1383
    %v1493 = vadd.f32 %v1492, %v1385
    %v1494 = vadd.f32 %v1493, %v1387
    %v1495 = vadd.f32 %v1494, %v1389
    %v1496 = vadd.f32 %v1495, %v1391
    %v1497 = vadd.f32 %v1496, %v1393
    %v1498 = vadd.f32 %v1497, %v1395
    %v1499 = vadd.f32 %v1498, %v1397
    %v1500 = vadd.f32 %v1499, %v1399
    %v1501 = vadd.f32 %v1500, %v1401
    %v1502 = vadd.f32 %v1501, %v1403
    %v1503 = vadd.f32 %v1502, %v1405
    %v1504 = vadd.f32 %v1503, %v1407
    %v1505 = vadd.f32 %v1504, %v1409
    %v1506 = vadd.f32 %v1505, %v1411
    %v1507 = vrot.slane %v1506, 4
    %v1508 = vadd.f32 %v1506, %v1507
    %v1509 = vrot.slane %v1508, 2
    %v1510 = vadd.f32 %v1508, %v1509
    %v1511 = vrot.slane %v1510, 1
    %v1512 = vadd.f32 %v1510, %v1511
    %v1513 = vlog2.pop %v1512
    %v1514 = vmul.f32 %v1513, 0.6931472
    %v1515 = vadd.f32 %v1514, %v1363
    %v1516 = vadd.f32 %v1219, %v1476
    %v1517 = vadd.f32 %v1220, %v1477
    %v1518 = vadd.f32 %v1221, %v1478
    %v1519 = vadd.f32 %v1222, %v1479
    %v1520 = vadd.f32 %v1223, %v1480
    %v1521 = vadd.f32 %v1224, %v1481
    %v1522 = vadd.f32 %v1225, %v1482
    %v1523 = vadd.f32 %v1226, %v1483
    %v1524 = vadd.f32 %v1227, %v1484
    %v1525 = vadd.f32 %v1228, %v1485
    %v1526 = vadd.f32 %v1229, %v1486
    %v1527 = vadd.f32 %v1230, %v1487
    %v1528 = vadd.f32 %v1231, %v1488
    %v1529 = vadd.f32 %v1232, %v1489
    %v1530 = vadd.f32 %v1233, %v1490
    %v1531 = vadd.f32 %v1234, %v1491
    %v1532 = vmax.f32 %v1516, 0.0
    %v1533 = vmax.f32 %v1517, 0.0
    %v1534 = vmax.f32 %v1518, 0.0
    %v1535 = vmax.f32 %v1519, 0.0
    %v1536 = vmax.f32 %v1520, 0.0
    %v1537 = vmax.f32 %v1521, 0.0
    %v1538 = vmax.f32 %v1522, 0.0
    %v1539 = vmax.f32 %v1523, 0.0
    %v1540 = vmax.f32 %v1524, 0.0
    %v1541 = vmax.f32 %v1525, 0.0
    %v1542 = vmax.f32 %v1526, 0.0
    %v1543 = vmax.f32 %v1527, 0.0
    %v1544 = vmax.f32 %v1528, 0.0
    %v1545 = vmax.f32 %v1529, 0.0
    %v1546 = vmax.f32 %v1530, 0.0
    %v1547 = vmax.f32 %v1531, 0.0
    %v1548 = vand.u32 2147483647, %v1516
    %v1549 = vand.u32 2147483647, %v1517
    %v1550 = vand.u32 2147483647, %v1518
    %v1551 = vand.u32 2147483647, %v1519
    %v1552 = vand.u32 2147483647, %v1520
    %v1553 = vand.u32 2147483647, %v1521
    %v1554 = vand.u32 2147483647, %v1522
    %v1555 = vand.u32 2147483647, %v1523
    %v1556 = vand.u32 2147483647, %v1524
    %v1557 = vand.u32 2147483647, %v1525
    %v1558 = vand.u32 2147483647, %v1526
    %v1559 = vand.u32 2147483647, %v1527
    %v1560 = vand.u32 2147483647, %v1528
    %v1561 = vand.u32 2147483647, %v1529
    %v1562 = vand.u32 2147483647, %v1530
    %v1563 = vand.u32 2147483647, %v1531
    %v1564 = vsub.f32 0.0, %v1548
    %v1565 = vsub.f32 0.0, %v1549
    %v1566 = vsub.f32 0.0, %v1550
    %v1567 = vsub.f32 0.0, %v1551
    %v1568 = vsub.f32 0.0, %v1552
    %v1569 = vsub.f32 0.0, %v1553
    %v1570 = vsub.f32 0.0, %v1554
    %v1571 = vsub.f32 0.0, %v1555
    %v1572 = vsub.f32 0.0, %v1556
    %v1573 = vsub.f32 0.0, %v1557
    %v1574 = vsub.f32 0.0, %v1558
    %v1575 = vsub.f32 0.0, %v1559
    %v1576 = vsub.f32 0.0, %v1560
    %v1577 = vsub.f32 0.0, %v1561
    %v1578 = vsub.f32 0.0, %v1562
    %v1579 = vsub.f32 0.0, %v1563
    %v1580 = vmul.f32 %v1564, 1.442695
    %v1581 = vpow.pop %v1580
    %v1582 = vmul.f32 %v1565, 1.442695
    %v1583 = vpow.pop %v1582
    %v1584 = vmul.f32 %v1566, 1.442695
    %v1585 = vpow.pop %v1584
    %v1586 = vmul.f32 %v1567, 1.442695
    %v1587 = vpow.pop %v1586
    %v1588 = vmul.f32 %v1568, 1.442695
    %v1589 = vpow.pop %v1588
    %v1590 = vmul.f32 %v1569, 1.442695
    %v1591 = vpow.pop %v1590
    %v1592 = vmul.f32 %v1570, 1.442695
    %v1593 = vpow.pop %v1592
    %v1594 = vmul.f32 %v1571, 1.442695
    %v1595 = vpow.pop %v1594
    %v1596 = vmul.f32 %v1572, 1.442695
    %v1597 = vpow.pop %v1596
    %v1598 = vmul.f32 %v1573, 1.442695
    %v1599 = vpow.pop %v1598
    %v1600 = vmul.f32 %v1574, 1.442695
    %v1601 = vpow.pop %v1600
    %v1602 = vmul.f32 %v1575, 1.442695
    %v1603 = vpow.pop %v1602
    %v1604 = vmul.f32 %v1576, 1.442695
    %v1605 = vpow.pop %v1604
    %v1606 = vmul.f32 %v1577, 1.442695
    %v1607 = vpow.pop %v1606
    %v1608 = vmul.f32 %v1578, 1.442695
    %v1609 = vpow.pop %v1608
    %v1610 = vmul.f32 %v1579, 1.442695
    %v1611 = vpow.pop %v1610
    %v1612 = vadd.f32 %v1581, 1.0
    %v1613 = vadd.f32 %v1583, 1.0
    %v1614 = vadd.f32 %v1585, 1.0
    %v1615 = vadd.f32 %v1587, 1.0
    %v1616 = vadd.f32 %v1589, 1.0
    %v1617 = vadd.f32 %v1591, 1.0
    %v1618 = vadd.f32 %v1593, 1.0
    %v1619 = vadd.f32 %v1595, 1.0
    %v1620 = vadd.f32 %v1597, 1.0
    %v1621 = vadd.f32 %v1599, 1.0
    %v1622 = vadd.f32 %v1601, 1.0
    %v1623 = vadd.f32 %v1603, 1.0
    %v1624 = vadd.f32 %v1605, 1.0
    %v1625 = vadd.f32 %v1607, 1.0
    %v1626 = vadd.f32 %v1609, 1.0
    %v1627 = vadd.f32 %v1611, 1.0
    %v1628 = vlog2.pop %v1612
    %v1629 = vmul.f32 %v1628, 0.6931472
    %v1630 = vlog2.pop %v1613
    %v1631 = vmul.f32 %v1630, 0.6931472
    %v1632 = vlog2.pop %v1614
    %v1633 = vmul.f32 %v1632, 0.6931472
    %v1634 = vlog2.pop %v1615
    %v1635 = vmul.f32 %v1634, 0.6931472
    %v1636 = vlog2.pop %v1616
    %v1637 = vmul.f32 %v1636, 0.6931472
    %v1638 = vlog2.pop %v1617
    %v1639 = vmul.f32 %v1638, 0.6931472
    %v1640 = vlog2.pop %v1618
    %v1641 = vmul.f32 %v1640, 0.6931472
    %v1642 = vlog2.pop %v1619
    %v1643 = vmul.f32 %v1642, 0.6931472
    %v1644 = vlog2.pop %v1620
    %v1645 = vmul.f32 %v1644, 0.6931472
    %v1646 = vlog2.pop %v1621
    %v1647 = vmul.f32 %v1646, 0.6931472
    %v1648 = vlog2.pop %v1622
    %v1649 = vmul.f32 %v1648, 0.6931472
    %v1650 = vlog2.pop %v1623
    %v1651 = vmul.f32 %v1650, 0.6931472
    %v1652 = vlog2.pop %v1624
    %v1653 = vmul.f32 %v1652, 0.6931472
    %v1654 = vlog2.pop %v1625
    %v1655 = vmul.f32 %v1654, 0.6931472
    %v1656 = vlog2.pop %v1626
    %v1657 = vmul.f32 %v1656, 0.6931472
    %v1658 = vlog2.pop %v1627
    %v1659 = vmul.f32 %v1658, 0.6931472
    %v1660 = vadd.f32 %v1532, %v1629
    %v1661 = vadd.f32 %v1533, %v1631
    %v1662 = vadd.f32 %v1534, %v1633
    %v1663 = vadd.f32 %v1535, %v1635
    %v1664 = vadd.f32 %v1536, %v1637
    %v1665 = vadd.f32 %v1537, %v1639
    %v1666 = vadd.f32 %v1538, %v1641
    %v1667 = vadd.f32 %v1539, %v1643
    %v1668 = vadd.f32 %v1540, %v1645
    %v1669 = vadd.f32 %v1541, %v1647
    %v1670 = vadd.f32 %v1542, %v1649
    %v1671 = vadd.f32 %v1543, %v1651
    %v1672 = vadd.f32 %v1544, %v1653
    %v1673 = vadd.f32 %v1545, %v1655
    %v1674 = vadd.f32 %v1546, %v1657
    %v1675 = vadd.f32 %v1547, %v1659
    %v1676 = vmul.f32 %v1660, 0.041666668
    %v1677 = vmul.f32 %v1661, 0.041666668
    %v1678 = vmul.f32 %v1662, 0.041666668
    %v1679 = vmul.f32 %v1663, 0.041666668
    %v1680 = vmul.f32 %v1664, 0.041666668
    %v1681 = vmul.f32 %v1665, 0.041666668
    %v1682 = vmul.f32 %v1666, 0.041666668
    %v1683 = vmul.f32 %v1667, 0.041666668
    %v1684 = vmul.f32 %v1668, 0.041666668
    %v1685 = vmul.f32 %v1669, 0.041666668
    %v1686 = vmul.f32 %v1670, 0.041666668
    %v1687 = vmul.f32 %v1671, 0.041666668
    %v1688 = vmul.f32 %v1672, 0.041666668
    %v1689 = vmul.f32 %v1673, 0.041666668
    %v1690 = vmul.f32 %v1674, 0.041666668
    %v1691 = vmul.f32 %v1675, 0.041666668
    %v1692 = vadd.f32 %v1258, %v1515
    %v1693 = vmax.f32 %v1692, 0.0
    %v1694 = vand.u32 2147483647, %v1692
    %v1695 = vsub.f32 0.0, %v1694
    %v1696 = vmul.f32 %v1695, 1.442695
    %v1697 = vpow.pop %v1696
    %v1698 = vadd.f32 %v1697, 1.0
    %v1699 = vlog2.pop %v1698
    %v1700 = vmul.f32 %v1699, 0.6931472
    %v1701 = vadd.f32 %v1693, %v1700
    %v1702 = vmul.f32 %v1701, 0.041666668
    %vm1703 = vcmask 7168
    %v1704 = vsel %vm1703, %v489, 0.0
    %v1705 = vsel %vm1703, %v490, 0.0
    %v1706 = vadd.f32 %v1704, %v1705
    %v1707 = vsel %vm1703, %v491, 0.0
    %v1708 = vadd.f32 %v1706, %v1707
    %v1709 = vsel %vm1703, %v492, 0.0
    %v1710 = vadd.f32 %v1708, %v1709
    %v1711 = vsel %vm1703, %v493, 0.0
    %v1712 = vadd.f32 %v1710, %v1711
    %v1713 = vsel %vm1703, %v494, 0.0
    %v1714 = vadd.f32 %v1712, %v1713
    %v1715 = vsel %vm1703, %v495, 0.0
    %v1716 = vadd.f32 %v1714, %v1715
    %v1717 = vsel %vm1703, %v496, 0.0
    %v1718 = vadd.f32 %v1716, %v1717
    %v1719 = vsel %vm1703, %v497, 0.0
    %v1720 = vadd.f32 %v1718, %v1719
    %v1721 = vsel %vm1703, %v498, 0.0
    %v1722 = vadd.f32 %v1720, %v1721
    %v1723 = vsel %vm1703, %v499, 0.0
    %v1724 = vadd.f32 %v1722, %v1723
    %v1725 = vsel %vm1703, %v500, 0.0
    %v1726 = vadd.f32 %v1724, %v1725
    %v1727 = vsel %vm1703, %v501, 0.0
    %v1728 = vadd.f32 %v1726, %v1727
    %v1729 = vsel %vm1703, %v502, 0.0
    %v1730 = vadd.f32 %v1728, %v1729
    %v1731 = vsel %vm1703, %v503, 0.0
    %v1732 = vadd.f32 %v1730, %v1731
    %v1733 = vsel %vm1703, %v504, 0.0
    %v1734 = vadd.f32 %v1732, %v1733
    %1735 = vadd.xlane.f32.xlu0 %v1734
    %v1736 = vpop.xlane.xlu0 %1735
    %v1737 = vrot.slane %v1736, 4
    %v1738 = vadd.f32 %v1736, %v1737
    %v1739 = vrot.slane %v1738, 2
    %v1740 = vadd.f32 %v1738, %v1739
    %v1741 = vrot.slane %v1740, 1
    %v1742 = vadd.f32 %v1740, %v1741
    %s1743 = vtos %v1742
    %v1744 = vstv %s1743
    %vm1745 = vcmask 1040384
    %v1746 = vsel %vm1745, %v551, 0.0
    %1747 = vadd.xlane.f32.xlu0 %v1746
    %v1748 = vpop.xlane.xlu0 %1747
    %v1749 = vrot.slane %v1748, 4
    %v1750 = vadd.f32 %v1748, %v1749
    %v1751 = vrot.slane %v1750, 2
    %v1752 = vadd.f32 %v1750, %v1751
    %v1753 = vrot.slane %v1752, 1
    %v1754 = vadd.f32 %v1752, %v1753
    %s1755 = vtos %v1754
    %v1756 = vstv %s1755
    %v1757 = vmul.f32 %v1676, %v489
    %v1758 = vmul.f32 %v1677, %v490
    %v1759 = vmul.f32 %v1678, %v491
    %v1760 = vmul.f32 %v1679, %v492
    %v1761 = vmul.f32 %v1680, %v493
    %v1762 = vmul.f32 %v1681, %v494
    %v1763 = vmul.f32 %v1682, %v495
    %v1764 = vmul.f32 %v1683, %v496
    %v1765 = vmul.f32 %v1684, %v497
    %v1766 = vmul.f32 %v1685, %v498
    %v1767 = vmul.f32 %v1686, %v499
    %v1768 = vmul.f32 %v1687, %v500
    %v1769 = vmul.f32 %v1688, %v501
    %v1770 = vmul.f32 %v1689, %v502
    %v1771 = vmul.f32 %v1690, %v503
    %v1772 = vmul.f32 %v1691, %v504
    %v1773 = vsel %vm1703, %v1757, 0.0
    %v1774 = vsel %vm1703, %v1758, 0.0
    %v1775 = vadd.f32 %v1773, %v1774
    %v1776 = vsel %vm1703, %v1759, 0.0
    %v1777 = vadd.f32 %v1775, %v1776
    %v1778 = vsel %vm1703, %v1760, 0.0
    %v1779 = vadd.f32 %v1777, %v1778
    %v1780 = vsel %vm1703, %v1761, 0.0
    %v1781 = vadd.f32 %v1779, %v1780
    %v1782 = vsel %vm1703, %v1762, 0.0
    %v1783 = vadd.f32 %v1781, %v1782
    %v1784 = vsel %vm1703, %v1763, 0.0
    %v1785 = vadd.f32 %v1783, %v1784
    %v1786 = vsel %vm1703, %v1764, 0.0
    %v1787 = vadd.f32 %v1785, %v1786
    %v1788 = vsel %vm1703, %v1765, 0.0
    %v1789 = vadd.f32 %v1787, %v1788
    %v1790 = vsel %vm1703, %v1766, 0.0
    %v1791 = vadd.f32 %v1789, %v1790
    %v1792 = vsel %vm1703, %v1767, 0.0
    %v1793 = vadd.f32 %v1791, %v1792
    %v1794 = vsel %vm1703, %v1768, 0.0
    %v1795 = vadd.f32 %v1793, %v1794
    %v1796 = vsel %vm1703, %v1769, 0.0
    %v1797 = vadd.f32 %v1795, %v1796
    %v1798 = vsel %vm1703, %v1770, 0.0
    %v1799 = vadd.f32 %v1797, %v1798
    %v1800 = vsel %vm1703, %v1771, 0.0
    %v1801 = vadd.f32 %v1799, %v1800
    %v1802 = vsel %vm1703, %v1772, 0.0
    %v1803 = vadd.f32 %v1801, %v1802
    %1804 = vadd.xlane.f32.xlu0 %v1803
    %v1805 = vpop.xlane.xlu0 %1804
    %v1806 = vrot.slane %v1805, 4
    %v1807 = vadd.f32 %v1805, %v1806
    %v1808 = vrot.slane %v1807, 2
    %v1809 = vadd.f32 %v1807, %v1808
    %v1810 = vrot.slane %v1809, 1
    %v1811 = vadd.f32 %v1809, %v1810
    %s1812 = vtos %v1811
    %v1813 = vrcp.pop %v1744
    %s1814 = vtos %v1813
    %s1815 = smul.f32 %s1812, %s1814
    %v1816 = vmul.f32 %v1702, %v551
    %v1817 = vsel %vm1745, %v1816, 0.0
    %1818 = vadd.xlane.f32.xlu0 %v1817
    %v1819 = vpop.xlane.xlu0 %1818
    %v1820 = vrot.slane %v1819, 4
    %v1821 = vadd.f32 %v1819, %v1820
    %v1822 = vrot.slane %v1821, 2
    %v1823 = vadd.f32 %v1821, %v1822
    %v1824 = vrot.slane %v1823, 1
    %v1825 = vadd.f32 %v1823, %v1824
    %s1826 = vtos %v1825
    %v1827 = vrcp.pop %v1756
    %s1828 = vtos %v1827
    %s1829 = smul.f32 %s1826, %s1828
    %s1830 = sadd.f32 %s1815, %s1829
    %s1831 = smul.f32 %s1830, 0.5
    %s1832 = scalar_lea.smem [#allocation8], 0
    %1833 = sst [smem:[%s1832]] %s1831
    // Predicated region
    $region41: #{coarse_matching_loss.1} parent=1 // pred_check
      _
    $region42: #{coarse_matching_loss.1} parent=1 // pred_check_branch
      %1835 = sbr.rel (0) target = $region44
    $region43: #{coarse_matching_loss.1} parent=1 // pred_region
      %s1837 = ssub.s32 16, 16
      %1838 = vsyncadd [#allocation3], %s1837
      %1841 = dma.smem_to_hbm [#allocation8], 16, %s5, [#allocation3]
    $region44: #{coarse_matching_loss.1} parent=1 // pred_fallthru
      _
    // Predicated region
    $region45: #{coarse_matching_loss.1} parent=1 // pred_check
      _
    $region46: #{coarse_matching_loss.1} parent=1 // pred_check_branch
      %1843 = sbr.rel (0) target = $region48
    $region47: #{coarse_matching_loss.1} parent=1 // pred_region
      %1844 = dma.done [#allocation3], 16
    $region48: #{coarse_matching_loss.1} parent=1 // pred_fallthru
      _
    %1845 = sfence
    %1846 = vsyncpa [#allocation3], 1
    %1847 = vsyncpa [#allocation4], 1
    %1848 = vsyncpa [#allocation6], 1

</llo_original>
